<compile_context>
chip_gen: v6e
topology: v6e:2x2x1
jax: 0.10.0
libtpu: 0.0.40
codegen_flags: <defaults>
</compile_context>

<pallas_src>
import functools
import math

import jax
import jax.numpy as jnp
from jax.experimental import pallas as pl
from jax.experimental.pallas import tpu as pltpu


# ----------------------------- small helpers --------------------------------

def _round_up(x, m):
  return ((x + m - 1) // m) * m


def _nbytes(x):
  return int(x.size) * jnp.dtype(x.dtype).itemsize


def _vmem_budget(nbytes):
  # Explicit scoped-VMEM request (defaults: 16 MiB v5e / 32 MiB v6e-v7x).
  # TODO(synk): clamp below 64 MiB when targeting v7x (physical VMEM per TC).
  return int(min(max(2 * nbytes + (4 << 20), 32 << 20), 110 << 20))


# --------------------------- core decoder-step kernel ------------------------

def _decoder_core_kernel(
    # data refs
    x_t_ref, h_prev_ref, c_prev_ref, enc_out_ref, enc_fea_ref, enc_mask_ref,
    ct_e_in_ref, sum_prev_ref, prev_s_ref, prev_proj_ref, prev_len_ref,
    # weight refs
    wxc_ref, bxc_ref, wih_ref, whh_ref, blstm_ref,
    wse_ref, bse_ref, ve_ref,
    wpd_ref, wsd_ref, bsd_ref, vd_ref,
    wpg_ce_ref, wpg_cd_ref, wpg_h_ref, wpg_c_ref, wpg_x_ref, bpg_ref,
    wv_ref, bv_ref,
    # output refs
    out_v_ref, pgen_ref, attnw_ref, h_out_ref, c_out_ref, ct_e_out_ref,
    sum_out_ref, hproj_ref,
    *, intra_encoder, intra_decoder, has_sum_prev):
  f32 = jnp.float32
  B, S, D = enc_out_ref.shape          # D = 2 * hidden_dim
  H = h_prev_ref.shape[1]
  E = x_t_ref.shape[1]

  x_t = x_t_ref[...].astype(f32)
  h_prev = h_prev_ref[...].astype(f32)
  c_prev = c_prev_ref[...].astype(f32)
  ct_e_in = ct_e_in_ref[...].astype(f32)

  # ---- x = x_context(cat([x_t, ct_e])): split concat into two matmuls.
  wxc = wxc_ref[...].astype(f32)        # (E + D, E) rows [x_t | ct_e]
  x = (jnp.dot(x_t, wxc[:E, :], preferred_element_type=f32)
       + jnp.dot(ct_e_in, wxc[E:, :], preferred_element_type=f32)
       + bxc_ref[...].astype(f32))      # (B, E)

  # ---- LSTMCell (PyTorch gate order i, f, g, o).
  gates = (jnp.dot(x, wih_ref[...].astype(f32), preferred_element_type=f32)
           + jnp.dot(h_prev, whh_ref[...].astype(f32), preferred_element_type=f32)
           + blstm_ref[...].astype(f32))             # (B, 4H)
  i_g = jax.nn.sigmoid(gates[:, 0:H])
  f_g = jax.nn.sigmoid(gates[:, H:2 * H])
  g_g = jnp.tanh(gates[:, 2 * H:3 * H])
  o_g = jax.nn.sigmoid(gates[:, 3 * H:4 * H])
  c_new = f_g * c_prev + i_g * g_g
  h_new = o_g * jnp.tanh(c_new)                      # dec_h

  # ---- intra-temporal encoder attention.  W_h(enc_out) is the step-invariant
  # enc_fea input (hoisted out of the per-step kernel).
  wse = wse_ref[...].astype(f32)                     # (2H, D) rows [h | c]
  dec_fea = (jnp.dot(h_new, wse[:H, :], preferred_element_type=f32)
             + jnp.dot(c_new, wse[H:, :], preferred_element_type=f32)
             + bse_ref[...].astype(f32))             # (B, D)
  et = jnp.tanh(enc_fea_ref[...].astype(f32) + dec_fea[:, None, :])
  ve = ve_ref[...].astype(f32)                       # (1, D)
  scores = jnp.sum(et * ve[None, :, :], axis=-1)     # (B, S) lane reduce

  sum_prev = sum_prev_ref[...].astype(f32)           # (B, S)
  if intra_encoder:
    exp_et = jnp.exp(scores)
    et1 = exp_et / sum_prev if has_sum_prev else exp_et
    sum_new = sum_prev + exp_et                      # step0: sum_prev == 1e-10
  else:
    sm = scores - jnp.max(scores, axis=1, keepdims=True)
    e = jnp.exp(sm)
    et1 = e / jnp.sum(e, axis=1, keepdims=True)
    sum_new = sum_prev                               # pass-through (aliased)

  mask = enc_mask_ref[...].astype(f32)
  at = et1 * mask
  at = at / jnp.sum(at, axis=1, keepdims=True)

  h_enc = enc_out_ref[...].astype(f32)
  if S >= 128:
    # MXU path for production-length sources.
    ct_e = jnp.einsum('bs,bsd->bd', at, h_enc, preferred_element_type=f32)
  else:
    ct_e = jnp.sum(at[:, :, None] * h_enc, axis=1)   # (B, D)

  # ---- intra-decoder attention over a fixed-size, length-masked history.
  if intra_decoder:
    t_len = prev_len_ref[0]                          # SMEM scalar
    prev_s = prev_s_ref[...].astype(f32)             # (B, Tmax, H)
    prev_pj = prev_proj_ref[...].astype(f32)         # cached W_prev(prev_s)
    Tm = prev_s.shape[1]
    dfd = (jnp.dot(h_new, wsd_ref[...].astype(f32), preferred_element_type=f32)
           + bsd_ref[...].astype(f32))               # (B, H)
    etd = jnp.tanh(prev_pj + dfd[:, None, :])
    vd = vd_ref[...].astype(f32)                     # (1, H)
    sd = jnp.sum(etd * vd[None, :, :], axis=-1)      # (B, Tm)
    tpos = jax.lax.broadcasted_iota(jnp.int32, (B, Tm), 1)
    sd = jnp.where(tpos < t_len, sd, -1e30)
    md = jnp.max(sd, axis=1, keepdims=True)
    ed = jnp.exp(sd - md)
    atd = ed / jnp.sum(ed, axis=1, keepdims=True)
    # When t_len == 0 all rows are masked uniformly and the buffer is zeros,
    # so ct_d is exactly 0 (matches the torch "prev_s is None" branch).
    ct_d = jnp.sum(atd[:, :, None] * prev_s, axis=1)  # (B, H)
  else:
    ct_d = jnp.zeros((B, H), f32)

  # ---- p_gen = sigmoid(Wp . cat([ct_e, ct_d, dec_h, dec_c, x])) as lane
  # reduces against pre-split row-vector weights (no concat, no width-1 matmul).
  p_gen_logit = (
      jnp.sum(ct_e * wpg_ce_ref[...].astype(f32), axis=-1, keepdims=True)
      + jnp.sum(ct_d * wpg_cd_ref[...].astype(f32), axis=-1, keepdims=True)
      + jnp.sum(h_new * wpg_h_ref[...].astype(f32), axis=-1, keepdims=True)
      + jnp.sum(c_new * wpg_c_ref[...].astype(f32), axis=-1, keepdims=True)
      + jnp.sum(x * wpg_x_ref[...].astype(f32), axis=-1, keepdims=True)
      + bpg_ref[...].astype(f32))                    # (B, 1)
  p_gen = jax.nn.sigmoid(p_gen_logit)

  # ---- V projection (V1 + softmax + pointer mix live in the vocab kernel).
  wv = wv_ref[...].astype(f32)                       # (4H, H) rows [h|ct_e|ct_d]
  out_v = (jnp.dot(h_new, wv[:H, :], preferred_element_type=f32)
           + jnp.dot(ct_e, wv[H:3 * H, :], preferred_element_type=f32)
           + jnp.dot(ct_d, wv[3 * H:, :], preferred_element_type=f32)
           + bv_ref[...].astype(f32))                # (B, H)

  # Projection of the new decoder state for the intra-decoder cache.
  hproj = jnp.dot(h_new, wpd_ref[...].astype(f32), preferred_element_type=f32)

  out_v_ref[...] = out_v.astype(out_v_ref.dtype)
  pgen_ref[...] = p_gen.astype(pgen_ref.dtype)
  attnw_ref[...] = ((1.0 - p_gen) * at).astype(attnw_ref.dtype)
  h_out_ref[...] = h_new.astype(h_out_ref.dtype)
  c_out_ref[...] = c_new.astype(c_out_ref.dtype)
  ct_e_out_ref[...] = ct_e.astype(ct_e_out_ref.dtype)
  sum_out_ref[...] = sum_new.astype(sum_out_ref.dtype)
  hproj_ref[...] = hproj.astype(hproj_ref.dtype)


# --------------------- vocab-tiled V1 + softmax + pointer --------------------

def _vocab_pointer_kernel(out_ref, pgen_ref, attnw_ref, ids_ref,
                          wv1_ref, bv1_ref, final_ref, m_scr, l_scr,
                          *, v_tile):
  """grid = (2, num_vocab_tiles): pass 0 = online max/sum-exp, pass 1 = write."""
  f32 = jnp.float32
  p = pl.program_id(0)
  j = pl.program_id(1)

  wv1 = wv1_ref[...]                                 # (H, v_tile), f32 or bf16
  logits = (jnp.dot(out_ref[...].astype(wv1.dtype), wv1,
                    preferred_element_type=f32)
            + bv1_ref[...].astype(f32))              # (B, v_tile), f32 acc

  @pl.when((p == 0) & (j == 0))
  def _():
    m_scr[...] = jnp.full_like(m_scr, -1e30)
    l_scr[...] = jnp.zeros_like(l_scr)

  @pl.when(p == 0)
  def _():
    m_prev = m_scr[...]
    m_new = jnp.maximum(m_prev, jnp.max(logits, axis=1, keepdims=True))
    l_scr[...] = (l_scr[...] * jnp.exp(m_prev - m_new)
                  + jnp.sum(jnp.exp(logits - m_new), axis=1, keepdims=True))
    m_scr[...] = m_new

  @pl.when(p == 1)
  def _():
    B, VT = final_ref.shape
    S = ids_ref.shape[0]
    # Padded columns carry a -1e30 bias -> exp underflows to exact zero, so
    # they contribute nothing here nor to the pass-0 stats.
    vocab_dist = pgen_ref[...] * jnp.exp(logits - m_scr[...]) / l_scr[...]

    # Pointer scatter_add restructured as a fori_loop over source positions:
    # only (B, v_tile) is live (no (B, S, V_ext) one-hot).
    base = j * v_tile
    lane = jax.lax.broadcasted_iota(jnp.int32, (B, VT), 1) + base

    def body(s, acc):
      idv = ids_ref[s]                               # (B, 1) int32
      av = attnw_ref[s]                              # (B, 1) f32
      return acc + jnp.where(lane == idv, av, 0.0)

    ptr = jax.lax.fori_loop(0, S, body, jnp.zeros((B, VT), f32))
    final_ref[...] = (vocab_dist + ptr).astype(final_ref.dtype)


def _vocab_pointer_call(out_v, p_gen, attn_w_t, ids_t, wv1_pad, bv1_pad, v_tile):
  B, H = out_v.shape
  S = ids_t.shape[0]
  v_pad = wv1_pad.shape[1]
  nvt = v_pad // v_tile

  kernel = functools.partial(_vocab_pointer_kernel, v_tile=v_tile)

  resident = (_nbytes(out_v) + _nbytes(p_gen) + _nbytes(attn_w_t)
              + _nbytes(ids_t)
              + 2 * H * v_tile * jnp.dtype(wv1_pad.dtype).itemsize
              + 2 * v_tile * 4 + 2 * B * v_tile * 4)

  return pl.pallas_call(
      kernel,
      out_shape=jax.ShapeDtypeStruct((B, v_pad), jnp.float32),
      grid=(2, nvt),
      in_specs=[
          pl.BlockSpec((B, H), lambda p, j: (0, 0)),          # V output
          pl.BlockSpec((B, 1), lambda p, j: (0, 0)),          # p_gen
          pl.BlockSpec((S, B, 1), lambda p, j: (0, 0, 0)),    # (1-p_gen)*attn
          pl.BlockSpec((S, B, 1), lambda p, j: (0, 0, 0)),    # extended ids
          pl.BlockSpec((H, v_tile), lambda p, j: (0, j)),     # wv1 tile
          pl.BlockSpec((1, v_tile), lambda p, j: (0, j)),     # bv1 tile
      ],
      # j*p keeps the output block resident (index 0) during the stats pass so
      # each vocab tile is flushed to HBM exactly once, with pass-1 data.
      out_specs=pl.BlockSpec((B, v_tile), lambda p, j: (0, j * p)),
      scratch_shapes=[pltpu.VMEM((B, 1), jnp.float32),        # running max
                      pltpu.VMEM((B, 1), jnp.float32)],       # running sum-exp
      compiler_params=pltpu.CompilerParams(
          # Vocab axis must be "arbitrary" because of the online softmax
          # stats; splitting passes into two calls would allow "parallel"
          # (v7x megacore).  # TODO(synk): split passes for v7x.
          dimension_semantics=("arbitrary", "arbitrary"),
          vmem_limit_bytes=_vmem_budget(resident)),
  )(out_v, p_gen, attn_w_t, ids_t, wv1_pad, bv1_pad)


# ------------------------------ wrapper API ----------------------------------

def prepare_decoder_params(params, n_extra, v_tile=1024, wv1_dtype=jnp.float32):
  """One-time weight prep (per model / per batch, NOT per decode step)."""
  H = params['whh'].shape[0]
  E = params['wxc'].shape[1]
  V = params['wv1'].shape[1]
  v_ext = V + n_extra
  lane_pad = _round_up(v_ext, 128)
  v_tile = min(v_tile, lane_pad)
  v_pad = _round_up(v_ext, v_tile)

  # V1 padded to a lane-dense multiple of the vocab tile.  Zero weight columns
  # + (-1e30) f32 bias columns -> exp underflows to exact 0 after softmax, so
  # the extra-vocab slots and lane padding are exact zeros (bias stays f32
  # even if the weights are stored in bf16).
  wv1_pad = jnp.pad(params['wv1'],
                    ((0, 0), (0, v_pad - V))).astype(wv1_dtype)
  bv1_pad = jnp.concatenate(
      [params['bv1'].astype(jnp.float32),
       jnp.full((1, v_pad - V), -1e30, jnp.float32)], axis=1)

  wpg = params['wpg']                                 # (5H + E, 1)
  prep = dict(
      wxc=params['wxc'], bxc=params['bxc'],
      wih=params['wih'], whh=params['whh'],
      blstm=params['b_ih'] + params['b_hh'],
      wse=params['wse'], bse=params['bse'], ve=params['ve'],
      wpd=params['wpd'], wsd=params['wsd'], bsd=params['bsd'], vd=params['vd'],
      wpg_ce=wpg[0:2 * H, 0].reshape(1, 2 * H),
      wpg_cd=wpg[2 * H:3 * H, 0].reshape(1, H),
      wpg_h=wpg[3 * H:4 * H, 0].reshape(1, H),
      wpg_c=wpg[4 * H:5 * H, 0].reshape(1, H),
      wpg_x=wpg[5 * H:, 0].reshape(1, E),
      bpg=params['bpg'],
      wv=params['wv'], bv=params['bv'],
      wv1_pad=wv1_pad, bv1_pad=bv1_pad,
      v_tile=int(v_tile), v_pad=int(v_pad), v_ext=int(v_ext),
  )
  return prep


def prepare_encoder_features(enc_out, enc_batch_extend_vocab, params):
  """Step-invariant work hoisted out of the per-step kernel (run once per
  sequence): W_h(enc_out) projection and the transposed extended-vocab ids."""
  enc_fea = jnp.einsum('bsd,de->bse', enc_out.astype(jnp.float32),
                       params['whe'].astype(jnp.float32))
  ids_t = jnp.transpose(enc_batch_extend_vocab.astype(jnp.int32))[:, :, None]
  return enc_fea, ids_t


def decoder_step(x_t, s_t, enc_out, enc_fea, enc_padding_mask, ct_e,
                 ids_t, sum_temporal_srcs, prev_s_buf, prev_proj_buf, prev_len,
                 prep, intra_encoder=True, intra_decoder=True):
  """One fused decoder step.

  Returns (final_dist, (h, c), ct_e, sum_temporal_srcs, prev_s_buf,
           prev_proj_buf, prev_len).  prev_s_buf / prev_proj_buf are fixed
  (B, T_max, H) zero-initialized buffers; prev_len counts valid rows.
  """
  h_prev, c_prev = s_t
  B, S, D = enc_out.shape
  H = h_prev.shape[1]

  has_sum = sum_temporal_srcs is not None
  sum_in = (sum_temporal_srcs.astype(jnp.float32) if has_sum
            else jnp.full((B, S), 1e-10, jnp.float32))
  plen_arr = jnp.full((1,), prev_len, jnp.int32)

  inputs = [
      x_t, h_prev, c_prev, enc_out, enc_fea, enc_padding_mask, ct_e,
      sum_in, prev_s_buf, prev_proj_buf, plen_arr,
      prep['wxc'], prep['bxc'], prep['wih'], prep['whh'], prep['blstm'],
      prep['wse'], prep['bse'], prep['ve'],
      prep['wpd'], prep['wsd'], prep['bsd'], prep['vd'],
      prep['wpg_ce'], prep['wpg_cd'], prep['wpg_h'], prep['wpg_c'],
      prep['wpg_x'], prep['bpg'], prep['wv'], prep['bv'],
  ]
  SUM_IN_IDX = 7

  vmem = pl.BlockSpec(memory_space=pltpu.MemorySpace.VMEM)
  smem = pl.BlockSpec(memory_space=pltpu.MemorySpace.SMEM)
  in_specs = [vmem] * 10 + [smem] + [vmem] * 20

  out_shapes = (
      jax.ShapeDtypeStruct((B, H), jnp.float32),   # V(out)
      jax.ShapeDtypeStruct((B, 1), jnp.float32),   # p_gen
      jax.ShapeDtypeStruct((B, S), jnp.float32),   # (1 - p_gen) * attn
      jax.ShapeDtypeStruct((B, H), jnp.float32),   # dec_h
      jax.ShapeDtypeStruct((B, H), jnp.float32),   # dec_c
      jax.ShapeDtypeStruct((B, D), jnp.float32),   # ct_e
      jax.ShapeDtypeStruct((B, S), jnp.float32),   # sum_temporal_srcs
      jax.ShapeDtypeStruct((B, H), jnp.float32),   # W_prev(dec_h) cache row
  )

  kernel = functools.partial(
      _decoder_core_kernel,
      intra_encoder=intra_encoder, intra_decoder=intra_decoder,
      has_sum_prev=has_sum)

  core_bytes = (sum(_nbytes(a) for a in inputs)
                + sum(4 * math.prod(o.shape) for o in out_shapes))

  (out_v, p_gen, attn_w, h_new, c_new, ct_e_new, sum_new, hproj) = pl.pallas_call(
      kernel,
      out_shape=out_shapes,
      in_specs=in_specs,
      out_specs=tuple(vmem for _ in out_shapes),
      # sum_temporal_srcs is updated in place (true in-place when donated).
      input_output_aliases={SUM_IN_IDX: 6},
      compiler_params=pltpu.CompilerParams(
          vmem_limit_bytes=_vmem_budget(core_bytes)),
  )(*inputs)

  # Vocab-tiled V1 + softmax + pointer mix (second pallas_call, gridded).
  attn_w_t = jnp.transpose(attn_w)[:, :, None]        # (S, B, 1)
  final_pad = _vocab_pointer_call(out_v, p_gen, attn_w_t, ids_t,
                                  prep['wv1_pad'], prep['bv1_pad'],
                                  prep['v_tile'])
  final_dist = final_pad[:, :prep['v_ext']]

  if intra_decoder:
    # Fixed-shape history update (no concat -> no per-step recompilation).
    prev_s_buf = jax.lax.dynamic_update_slice_in_dim(
        prev_s_buf, h_new[:, None, :], prev_len, axis=1)
    prev_proj_buf = jax.lax.dynamic_update_slice_in_dim(
        prev_proj_buf, hproj[:, None, :], prev_len, axis=1)
    prev_len = prev_len + 1

  new_sum = sum_new if intra_encoder else sum_temporal_srcs
  return (final_dist, (h_new, c_new), ct_e_new, new_sum,
          prev_s_buf, prev_proj_buf, prev_len)


# ----------------------------- pure-JAX reference ---------------------------

def _reference_decoder_step(x_t, s_t, enc_out, enc_padding_mask, ct_e, extra_zeros,
                            enc_batch_extend_vocab, sum_temporal_srcs, prev_s, params,
                            intra_encoder=True, intra_decoder=True):
  h_prev, c_prev = s_t
  B, S, D = enc_out.shape
  H = D // 2
  x = jnp.concatenate([x_t, ct_e], axis=1) @ params['wxc'] + params['bxc']
  gates = (x @ params['wih'] + params['b_ih']
           + h_prev @ params['whh'] + params['b_hh'])
  i_g = jax.nn.sigmoid(gates[:, :H])
  f_g = jax.nn.sigmoid(gates[:, H:2 * H])
  g_g = jnp.tanh(gates[:, 2 * H:3 * H])
  o_g = jax.nn.sigmoid(gates[:, 3 * H:])
  c_new = f_g * c_prev + i_g * g_g
  h_new = o_g * jnp.tanh(c_new)
  st_hat = jnp.concatenate([h_new, c_new], axis=1)

  et = jnp.einsum('bsd,de->bse', enc_out, params['whe'])
  dec_fea = st_hat @ params['wse'] + params['bse']
  et = jnp.tanh(et + dec_fea[:, None, :])
  scores = jnp.einsum('bsd,od->bso', et, params['ve'])[..., 0]
  if intra_encoder:
    exp_et = jnp.exp(scores)
    if sum_temporal_srcs is None:
      et1, new_sum = exp_et, 1e-10 + exp_et
    else:
      et1, new_sum = exp_et / sum_temporal_srcs, sum_temporal_srcs + exp_et
  else:
    et1, new_sum = jax.nn.softmax(scores, axis=1), sum_temporal_srcs
  at = et1 * enc_padding_mask
  at = at / jnp.sum(at, axis=1, keepdims=True)
  ct_e_new = jnp.einsum('bs,bsd->bd', at, enc_out)

  if not intra_decoder:
    ct_d, new_prev_s = jnp.zeros_like(h_new), prev_s
  elif prev_s is None:
    ct_d, new_prev_s = jnp.zeros_like(h_new), h_new[:, None, :]
  else:
    etd = jnp.einsum('bth,hk->btk', prev_s, params['wpd'])
    dfd = h_new @ params['wsd'] + params['bsd']
    etd = jnp.tanh(etd + dfd[:, None, :])
    sd = jnp.einsum('bth,oh->bto', etd, params['vd'])[..., 0]
    atd = jax.nn.softmax(sd, axis=1)
    ct_d = jnp.einsum('bt,bth->bh', atd, prev_s)
    new_prev_s = jnp.concatenate([prev_s, h_new[:, None, :]], axis=1)

  p_gen_in = jnp.concatenate([ct_e_new, ct_d, st_hat, x], axis=1)
  p_gen = jax.nn.sigmoid(p_gen_in @ params['wpg'] + params['bpg'])
  out = jnp.concatenate([h_new, ct_e_new, ct_d], axis=1) @ params['wv'] + params['bv']
  logits = out @ params['wv1'] + params['bv1']
  vocab_dist = p_gen * jax.nn.softmax(logits, axis=1)
  attn_ = (1.0 - p_gen) * at
  if extra_zeros is not None:
    vocab_dist = jnp.concatenate([vocab_dist, extra_zeros], axis=1)
  batch_idx = jnp.arange(B)[:, None]
  final = vocab_dist.at[batch_idx, enc_batch_extend_vocab].add(attn_)
  return final, (h_new, c_new), ct_e_new, new_sum, new_prev_s


def _init_params(key, hidden_dim, emb_dim, vocab_size):
  H, E, V = hidden_dim, emb_dim, vocab_size
  D = 2 * H
  ks = jax.random.split(key, 20)
  s = 0.1

  def u(k, shape):
    return jax.random.uniform(k, shape, jnp.float32, -s, s)

  return dict(
      wxc=u(ks[0], (E + D, E)), bxc=u(ks[1], (1, E)),
      wih=u(ks[2], (E, 4 * H)), whh=u(ks[3], (H, 4 * H)),
      b_ih=u(ks[4], (1, 4 * H)), b_hh=u(ks[5], (1, 4 * H)),
      whe=u(ks[6], (D, D)), wse=u(ks[7], (D, D)), bse=u(ks[8], (1, D)),
      ve=u(ks[9], (1, D)),
      wpd=u(ks[10], (H, H)), wsd=u(ks[11], (H, H)), bsd=u(ks[12], (1, H)),
      vd=u(ks[13], (1, H)),
      wpg=u(ks[14], (5 * H + E, 1)), bpg=u(ks[15], (1, 1)),
      wv=u(ks[16], (4 * H, H)), bv=u(ks[17], (1, H)),
      wv1=u(ks[18], (H, V)), bv1=u(ks[19], (1, V)),
  )


def _check(got, want, atol=2e-5, rtol=1e-4):
  assert got.shape == want.shape, (got.shape, want.shape)
  assert jnp.allclose(got, want, atol=atol, rtol=rtol), (
      float(jnp.max(jnp.abs(got - want))))


if __name__ == "__main__":
  B, S, H, E = 2, 8, 16, 32
  D = 2 * H
  VOCAB, N_EXTRA = 50, 4
  T_MAX = 4                                     # max decode steps tested

  key = jax.random.PRNGKey(0)
  kp, kd = jax.random.split(key)
  params = _init_params(kp, H, E, VOCAB)
  prep = prepare_decoder_params(params, n_extra=N_EXTRA, v_tile=1024)

  keys = jax.random.split(kd, 7)
  x_t1 = jax.random.normal(keys[0], (B, E), jnp.float32)
  x_t2 = jax.random.normal(keys[1], (B, E), jnp.float32)
  h0 = jax.random.normal(keys[2], (B, H), jnp.float32)
  c0 = jax.random.normal(keys[3], (B, H), jnp.float32)
  enc_out = jax.random.normal(keys[4], (B, S, D), jnp.float32)
  ct_e0 = jax.random.normal(keys[5], (B, D), jnp.float32)
  enc_ids = jax.random.randint(keys[6], (B, S), 0, VOCAB + N_EXTRA, jnp.int32)
  enc_padding_mask = jnp.array([[1.0] * S, [1.0] * (S - 2) + [0.0] * 2],
                               jnp.float32)
  extra_zeros = jnp.zeros((B, N_EXTRA), jnp.float32)

  # Once-per-sequence prep (step-invariant encoder projection, ids layout).
  enc_fea, ids_t = prepare_encoder_features(enc_out, enc_ids, params)

  # Fixed-shape intra-decoder history (zero-initialized).
  prev_s_buf = jnp.zeros((B, T_MAX, H), jnp.float32)
  prev_proj_buf = jnp.zeros((B, T_MAX, H), jnp.float32)
  prev_len = 0

  # ---- Step 1: no temporal history, no previous decoder states.
  (final1, s1, ct_e1, sum1, prev_s_buf, prev_proj_buf, prev_len) = decoder_step(
      x_t1, (h0, c0), enc_out, enc_fea, enc_padding_mask, ct_e0,
      ids_t, None, prev_s_buf, prev_proj_buf, prev_len, prep)
  jax.block_until_ready(final1)
  (rf1, rs1, rce1, rsum1, rprev1) = _reference_decoder_step(
      x_t1, (h0, c0), enc_out, enc_padding_mask, ct_e0,
      extra_zeros, enc_ids, None, None, params)

  _check(final1, rf1)
  _check(s1[0], rs1[0]); _check(s1[1], rs1[1])
  _check(ct_e1, rce1); _check(sum1, rsum1)
  _check(prev_s_buf[:, :prev_len], rprev1)

  # ---- Step 2: reuse accumulated state from step 1.
  (final2, s2, ct_e2, sum2, prev_s_buf, prev_proj_buf, prev_len) = decoder_step(
      x_t2, s1, enc_out, enc_fea, enc_padding_mask, ct_e1,
      ids_t, sum1, prev_s_buf, prev_proj_buf, prev_len, prep)
  jax.block_until_ready(final2)
  (rf2, rs2, rce2, rsum2, rprev2) = _reference_decoder_step(
      x_t2, rs1, enc_out, enc_padding_mask, rce1,
      extra_zeros, enc_ids, rsum1, rprev1, params)

  _check(final2, rf2)
  _check(s2[0], rs2[0]); _check(s2[1], rs2[1])
  _check(ct_e2, rce2); _check(sum2, rsum2)
  _check(prev_s_buf[:, :prev_len], rprev2)

  print("KERNEL_OK")
</pallas_src>

<mosaic_0001>
module attributes {stable_mosaic.version = 11 : i64} {
  func.func @_decoder_core_kernel(%arg0: memref<2x32xf32, #tpu.memory_space<vmem>>, %arg1: memref<2x16xf32, #tpu.memory_space<vmem>>, %arg2: memref<2x16xf32, #tpu.memory_space<vmem>>, %arg3: memref<2x8x32xf32, #tpu.memory_space<vmem>>, %arg4: memref<2x8x32xf32, #tpu.memory_space<vmem>>, %arg5: memref<2x8xf32, #tpu.memory_space<vmem>>, %arg6: memref<2x32xf32, #tpu.memory_space<vmem>>, %arg7: memref<2x8xf32, #tpu.memory_space<vmem>>, %arg8: memref<2x4x16xf32, #tpu.memory_space<vmem>>, %arg9: memref<2x4x16xf32, #tpu.memory_space<vmem>>, %arg10: memref<1xi32, #tpu.memory_space<smem>>, %arg11: memref<64x32xf32, #tpu.memory_space<vmem>>, %arg12: memref<1x32xf32, #tpu.memory_space<vmem>>, %arg13: memref<32x64xf32, #tpu.memory_space<vmem>>, %arg14: memref<16x64xf32, #tpu.memory_space<vmem>>, %arg15: memref<1x64xf32, #tpu.memory_space<vmem>>, %arg16: memref<32x32xf32, #tpu.memory_space<vmem>>, %arg17: memref<1x32xf32, #tpu.memory_space<vmem>>, %arg18: memref<1x32xf32, #tpu.memory_space<vmem>>, %arg19: memref<16x16xf32, #tpu.memory_space<vmem>>, %arg20: memref<16x16xf32, #tpu.memory_space<vmem>>, %arg21: memref<1x16xf32, #tpu.memory_space<vmem>>, %arg22: memref<1x16xf32, #tpu.memory_space<vmem>>, %arg23: memref<1x32xf32, #tpu.memory_space<vmem>>, %arg24: memref<1x16xf32, #tpu.memory_space<vmem>>, %arg25: memref<1x16xf32, #tpu.memory_space<vmem>>, %arg26: memref<1x16xf32, #tpu.memory_space<vmem>>, %arg27: memref<1x32xf32, #tpu.memory_space<vmem>>, %arg28: memref<1x1xf32, #tpu.memory_space<vmem>>, %arg29: memref<64x16xf32, #tpu.memory_space<vmem>>, %arg30: memref<1x16xf32, #tpu.memory_space<vmem>>, %arg31: memref<2x16xf32, #tpu.memory_space<vmem>>, %arg32: memref<2x1xf32, #tpu.memory_space<vmem>>, %arg33: memref<2x8xf32, #tpu.memory_space<vmem>>, %arg34: memref<2x16xf32, #tpu.memory_space<vmem>>, %arg35: memref<2x16xf32, #tpu.memory_space<vmem>>, %arg36: memref<2x32xf32, #tpu.memory_space<vmem>>, %arg37: memref<2x8xf32, #tpu.memory_space<vmem>>, %arg38: memref<2x16xf32, #tpu.memory_space<vmem>>) attributes {dimension_semantics = [], scalar_prefetch = 0 : i64, scratch_operands = 0 : i64, tpu.core_type = #tpu.core_type<tc>} {
    %c0 = arith.constant 0 : index
    %c0_0 = arith.constant 0 : index
    %0 = vector.load %arg0[%c0, %c0_0] : memref<2x32xf32, #tpu.memory_space<vmem>>, vector<2x32xf32>
    %c0_1 = arith.constant 0 : index
    %c0_2 = arith.constant 0 : index
    %1 = vector.load %arg1[%c0_1, %c0_2] : memref<2x16xf32, #tpu.memory_space<vmem>>, vector<2x16xf32>
    %c0_3 = arith.constant 0 : index
    %c0_4 = arith.constant 0 : index
    %2 = vector.load %arg2[%c0_3, %c0_4] : memref<2x16xf32, #tpu.memory_space<vmem>>, vector<2x16xf32>
    %c0_5 = arith.constant 0 : index
    %c0_6 = arith.constant 0 : index
    %3 = vector.load %arg6[%c0_5, %c0_6] : memref<2x32xf32, #tpu.memory_space<vmem>>, vector<2x32xf32>
    %c0_7 = arith.constant 0 : index
    %c0_8 = arith.constant 0 : index
    %4 = vector.load %arg11[%c0_7, %c0_8] : memref<64x32xf32, #tpu.memory_space<vmem>>, vector<64x32xf32>
    %5 = vector.extract_strided_slice %4 {offsets = [0, 0], sizes = [32, 32], strides = [1, 1]} : vector<64x32xf32> to vector<32x32xf32>
    %cst = arith.constant dense<0.000000e+00> : vector<2x32xf32>
    %6 = tpu.matmul %0, %5, %cst {dimension_numbers = #tpu.dot_dimension_numbers<[1], [0], [0], [1], [0, 0, 1, 1], [], []>} : vector<2x32xf32>, vector<32x32xf32>, vector<2x32xf32> -> vector<2x32xf32>
    %7 = vector.extract_strided_slice %4 {offsets = [32, 0], sizes = [32, 32], strides = [1, 1]} : vector<64x32xf32> to vector<32x32xf32>
    %cst_9 = arith.constant dense<0.000000e+00> : vector<2x32xf32>
    %8 = tpu.matmul %3, %7, %cst_9 {dimension_numbers = #tpu.dot_dimension_numbers<[1], [0], [0], [1], [0, 0, 1, 1], [], []>} : vector<2x32xf32>, vector<32x32xf32>, vector<2x32xf32> -> vector<2x32xf32>
    %9 = arith.addf %6, %8 : vector<2x32xf32>
    %c0_10 = arith.constant 0 : index
    %c0_11 = arith.constant 0 : index
    %10 = vector.load %arg12[%c0_10, %c0_11] : memref<1x32xf32, #tpu.memory_space<vmem>>, vector<1x32xf32>
    %11 = vector.broadcast %10 : vector<1x32xf32> to vector<2x32xf32>
    %12 = arith.addf %9, %11 : vector<2x32xf32>
    %c0_12 = arith.constant 0 : index
    %c0_13 = arith.constant 0 : index
    %13 = vector.load %arg13[%c0_12, %c0_13] : memref<32x64xf32, #tpu.memory_space<vmem>>, vector<32x64xf32>
    %cst_14 = arith.constant dense<0.000000e+00> : vector<2x64xf32>
    %14 = tpu.matmul %12, %13, %cst_14 {dimension_numbers = #tpu.dot_dimension_numbers<[1], [0], [0], [1], [0, 0, 1, 1], [], []>} : vector<2x32xf32>, vector<32x64xf32>, vector<2x64xf32> -> vector<2x64xf32>
    %c0_15 = arith.constant 0 : index
    %c0_16 = arith.constant 0 : index
    %15 = vector.load %arg14[%c0_15, %c0_16] : memref<16x64xf32, #tpu.memory_space<vmem>>, vector<16x64xf32>
    %cst_17 = arith.constant dense<0.000000e+00> : vector<2x64xf32>
    %16 = tpu.matmul %1, %15, %cst_17 {dimension_numbers = #tpu.dot_dimension_numbers<[1], [0], [0], [1], [0, 0, 1, 1], [], []>} : vector<2x16xf32>, vector<16x64xf32>, vector<2x64xf32> -> vector<2x64xf32>
    %17 = arith.addf %14, %16 : vector<2x64xf32>
    %c0_18 = arith.constant 0 : index
    %c0_19 = arith.constant 0 : index
    %18 = vector.load %arg15[%c0_18, %c0_19] : memref<1x64xf32, #tpu.memory_space<vmem>>, vector<1x64xf32>
    %19 = vector.broadcast %18 : vector<1x64xf32> to vector<2x64xf32>
    %20 = arith.addf %17, %19 : vector<2x64xf32>
    %21 = vector.extract_strided_slice %20 {offsets = [0, 0], sizes = [2, 16], strides = [1, 1]} : vector<2x64xf32> to vector<2x16xf32>
    %22 = arith.negf %21 : vector<2x16xf32>
    %23 = math.exp %22 : vector<2x16xf32>
    %cst_20 = arith.constant 1.000000e+00 : f32
    %24 = vector.broadcast %cst_20 : f32 to vector<2x16xf32>
    %25 = arith.addf %24, %23 : vector<2x16xf32>
    %26 = arith.divf %24, %25 : vector<2x16xf32>
    %27 = vector.extract_strided_slice %20 {offsets = [0, 16], sizes = [2, 16], strides = [1, 1]} : vector<2x64xf32> to vector<2x16xf32>
    %28 = arith.negf %27 : vector<2x16xf32>
    %29 = math.exp %28 : vector<2x16xf32>
    %cst_21 = arith.constant 1.000000e+00 : f32
    %30 = vector.broadcast %cst_21 : f32 to vector<2x16xf32>
    %31 = arith.addf %30, %29 : vector<2x16xf32>
    %32 = arith.divf %30, %31 : vector<2x16xf32>
    %33 = vector.extract_strided_slice %20 {offsets = [0, 32], sizes = [2, 16], strides = [1, 1]} : vector<2x64xf32> to vector<2x16xf32>
    %34 = math.tanh %33 : vector<2x16xf32>
    %35 = vector.extract_strided_slice %20 {offsets = [0, 48], sizes = [2, 16], strides = [1, 1]} : vector<2x64xf32> to vector<2x16xf32>
    %36 = arith.negf %35 : vector<2x16xf32>
    %37 = math.exp %36 : vector<2x16xf32>
    %cst_22 = arith.constant 1.000000e+00 : f32
    %38 = vector.broadcast %cst_22 : f32 to vector<2x16xf32>
    %39 = arith.addf %38, %37 : vector<2x16xf32>
    %40 = arith.divf %38, %39 : vector<2x16xf32>
    %41 = arith.mulf %32, %2 : vector<2x16xf32>
    %42 = arith.mulf %26, %34 : vector<2x16xf32>
    %43 = arith.addf %41, %42 : vector<2x16xf32>
    %44 = math.tanh %43 : vector<2x16xf32>
    %45 = arith.mulf %40, %44 : vector<2x16xf32>
    %c0_23 = arith.constant 0 : index
    %c0_24 = arith.constant 0 : index
    %46 = vector.load %arg16[%c0_23, %c0_24] : memref<32x32xf32, #tpu.memory_space<vmem>>, vector<32x32xf32>
    %47 = vector.extract_strided_slice %46 {offsets = [0, 0], sizes = [16, 32], strides = [1, 1]} : vector<32x32xf32> to vector<16x32xf32>
    %cst_25 = arith.constant dense<0.000000e+00> : vector<2x32xf32>
    %48 = tpu.matmul %45, %47, %cst_25 {dimension_numbers = #tpu.dot_dimension_numbers<[1], [0], [0], [1], [0, 0, 1, 1], [], []>} : vector<2x16xf32>, vector<16x32xf32>, vector<2x32xf32> -> vector<2x32xf32>
    %49 = vector.extract_strided_slice %46 {offsets = [16, 0], sizes = [16, 32], strides = [1, 1]} : vector<32x32xf32> to vector<16x32xf32>
    %cst_26 = arith.constant dense<0.000000e+00> : vector<2x32xf32>
    %50 = tpu.matmul %43, %49, %cst_26 {dimension_numbers = #tpu.dot_dimension_numbers<[1], [0], [0], [1], [0, 0, 1, 1], [], []>} : vector<2x16xf32>, vector<16x32xf32>, vector<2x32xf32> -> vector<2x32xf32>
    %51 = arith.addf %48, %50 : vector<2x32xf32>
    %c0_27 = arith.constant 0 : index
    %c0_28 = arith.constant 0 : index
    %52 = vector.load %arg17[%c0_27, %c0_28] : memref<1x32xf32, #tpu.memory_space<vmem>>, vector<1x32xf32>
    %53 = vector.broadcast %52 : vector<1x32xf32> to vector<2x32xf32>
    %54 = arith.addf %51, %53 : vector<2x32xf32>
    %c0_29 = arith.constant 0 : index
    %c0_30 = arith.constant 0 : index
    %c0_31 = arith.constant 0 : index
    %55 = vector.load %arg4[%c0_29, %c0_30, %c0_31] : memref<2x8x32xf32, #tpu.memory_space<vmem>>, vector<2x8x32xf32>
    %56 = vector.shape_cast %54 : vector<2x32xf32> to vector<2x1x32xf32>
    %57 = vector.broadcast %56 : vector<2x1x32xf32> to vector<2x8x32xf32>
    %58 = arith.addf %55, %57 : vector<2x8x32xf32>
    %59 = math.tanh %58 : vector<2x8x32xf32>
    %c0_32 = arith.constant 0 : index
    %c0_33 = arith.constant 0 : index
    %60 = vector.load %arg18[%c0_32, %c0_33] : memref<1x32xf32, #tpu.memory_space<vmem>>, vector<1x32xf32>
    %61 = vector.shape_cast %60 : vector<1x32xf32> to vector<1x1x32xf32>
    %62 = vector.broadcast %61 : vector<1x1x32xf32> to vector<2x8x32xf32>
    %63 = arith.mulf %59, %62 : vector<2x8x32xf32>
    %cst_34 = arith.constant dense<0.000000e+00> : vector<2x8xf32>
    %64 = vector.multi_reduction <add>, %63, %cst_34 [2] : vector<2x8x32xf32> to vector<2x8xf32>
    %c0_35 = arith.constant 0 : index
    %c0_36 = arith.constant 0 : index
    %65 = vector.load %arg7[%c0_35, %c0_36] : memref<2x8xf32, #tpu.memory_space<vmem>>, vector<2x8xf32>
    %66 = math.exp %64 : vector<2x8xf32>
    %67 = arith.addf %65, %66 : vector<2x8xf32>
    %c0_37 = arith.constant 0 : index
    %c0_38 = arith.constant 0 : index
    %68 = vector.load %arg5[%c0_37, %c0_38] : memref<2x8xf32, #tpu.memory_space<vmem>>, vector<2x8xf32>
    %69 = arith.mulf %66, %68 : vector<2x8xf32>
    %cst_39 = arith.constant dense<0.000000e+00> : vector<2xf32>
    %70 = vector.multi_reduction <add>, %69, %cst_39 [1] : vector<2x8xf32> to vector<2xf32>
    %71 = vector.shape_cast %70 : vector<2xf32> to vector<2x1xf32>
    %72 = vector.broadcast %71 : vector<2x1xf32> to vector<2x8xf32>
    %73 = arith.divf %69, %72 : vector<2x8xf32>
    %c0_40 = arith.constant 0 : index
    %c0_41 = arith.constant 0 : index
    %c0_42 = arith.constant 0 : index
    %74 = vector.load %arg3[%c0_40, %c0_41, %c0_42] : memref<2x8x32xf32, #tpu.memory_space<vmem>>, vector<2x8x32xf32>
    %75 = vector.shape_cast %73 : vector<2x8xf32> to vector<2x8x1xf32>
    %76 = vector.broadcast %75 : vector<2x8x1xf32> to vector<2x8x32xf32>
    %77 = arith.mulf %76, %74 : vector<2x8x32xf32>
    %cst_43 = arith.constant dense<0.000000e+00> : vector<2x32xf32>
    %78 = vector.multi_reduction <add>, %77, %cst_43 [1] : vector<2x8x32xf32> to vector<2x32xf32>
    %c0_44 = arith.constant 0 : index
    %79 = memref.load %arg10[%c0_44] : memref<1xi32, #tpu.memory_space<smem>>
    %c0_45 = arith.constant 0 : index
    %c0_46 = arith.constant 0 : index
    %c0_47 = arith.constant 0 : index
    %80 = vector.load %arg8[%c0_45, %c0_46, %c0_47] : memref<2x4x16xf32, #tpu.memory_space<vmem>>, vector<2x4x16xf32>
    %c0_48 = arith.constant 0 : index
    %c0_49 = arith.constant 0 : index
    %c0_50 = arith.constant 0 : index
    %81 = vector.load %arg9[%c0_48, %c0_49, %c0_50] : memref<2x4x16xf32, #tpu.memory_space<vmem>>, vector<2x4x16xf32>
    %c0_51 = arith.constant 0 : index
    %c0_52 = arith.constant 0 : index
    %82 = vector.load %arg20[%c0_51, %c0_52] : memref<16x16xf32, #tpu.memory_space<vmem>>, vector<16x16xf32>
    %cst_53 = arith.constant dense<0.000000e+00> : vector<2x16xf32>
    %83 = tpu.matmul %45, %82, %cst_53 {dimension_numbers = #tpu.dot_dimension_numbers<[1], [0], [0], [1], [0, 0, 1, 1], [], []>} : vector<2x16xf32>, vector<16x16xf32>, vector<2x16xf32> -> vector<2x16xf32>
    %c0_54 = arith.constant 0 : index
    %c0_55 = arith.constant 0 : index
    %84 = vector.load %arg21[%c0_54, %c0_55] : memref<1x16xf32, #tpu.memory_space<vmem>>, vector<1x16xf32>
    %85 = vector.broadcast %84 : vector<1x16xf32> to vector<2x16xf32>
    %86 = arith.addf %83, %85 : vector<2x16xf32>
    %87 = vector.shape_cast %86 : vector<2x16xf32> to vector<2x1x16xf32>
    %88 = vector.broadcast %87 : vector<2x1x16xf32> to vector<2x4x16xf32>
    %89 = arith.addf %81, %88 : vector<2x4x16xf32>
    %90 = math.tanh %89 : vector<2x4x16xf32>
    %c0_56 = arith.constant 0 : index
    %c0_57 = arith.constant 0 : index
    %91 = vector.load %arg22[%c0_56, %c0_57] : memref<1x16xf32, #tpu.memory_space<vmem>>, vector<1x16xf32>
    %92 = vector.shape_cast %91 : vector<1x16xf32> to vector<1x1x16xf32>
    %93 = vector.broadcast %92 : vector<1x1x16xf32> to vector<2x4x16xf32>
    %94 = arith.mulf %90, %93 : vector<2x4x16xf32>
    %cst_58 = arith.constant dense<0.000000e+00> : vector<2x4xf32>
    %95 = vector.multi_reduction <add>, %94, %cst_58 [2] : vector<2x4x16xf32> to vector<2x4xf32>
    %96 = tpu.iota {dimensions = array<i32: 1>} : vector<2x4xi32>
    %97 = vector.broadcast %79 : i32 to vector<2x4xi32>
    %98 = arith.cmpi slt, %96, %97 : vector<2x4xi32>
    %cst_59 = arith.constant -1.000000e+30 : f32
    %99 = vector.broadcast %cst_59 : f32 to vector<2x4xf32>
    %100 = arith.select %98, %95, %99 : vector<2x4xi1>, vector<2x4xf32>
    %cst_60 = arith.constant dense<0xFF800000> : vector<2xf32>
    %101 = vector.multi_reduction <maximumf>, %100, %cst_60 [1] : vector<2x4xf32> to vector<2xf32>
    %102 = vector.shape_cast %101 : vector<2xf32> to vector<2x1xf32>
    %103 = vector.broadcast %102 : vector<2x1xf32> to vector<2x4xf32>
    %104 = arith.subf %100, %103 : vector<2x4xf32>
    %105 = math.exp %104 : vector<2x4xf32>
    %cst_61 = arith.constant dense<0.000000e+00> : vector<2xf32>
    %106 = vector.multi_reduction <add>, %105, %cst_61 [1] : vector<2x4xf32> to vector<2xf32>
    %107 = vector.shape_cast %106 : vector<2xf32> to vector<2x1xf32>
    %108 = vector.broadcast %107 : vector<2x1xf32> to vector<2x4xf32>
    %109 = arith.divf %105, %108 : vector<2x4xf32>
    %110 = vector.shape_cast %109 : vector<2x4xf32> to vector<2x4x1xf32>
    %111 = vector.broadcast %110 : vector<2x4x1xf32> to vector<2x4x16xf32>
    %112 = arith.mulf %111, %80 : vector<2x4x16xf32>
    %cst_62 = arith.constant dense<0.000000e+00> : vector<2x16xf32>
    %113 = vector.multi_reduction <add>, %112, %cst_62 [1] : vector<2x4x16xf32> to vector<2x16xf32>
    %c0_63 = arith.constant 0 : index
    %c0_64 = arith.constant 0 : index
    %114 = vector.load %arg23[%c0_63, %c0_64] : memref<1x32xf32, #tpu.memory_space<vmem>>, vector<1x32xf32>
    %115 = vector.broadcast %114 : vector<1x32xf32> to vector<2x32xf32>
    %116 = arith.mulf %78, %115 : vector<2x32xf32>
    %cst_65 = arith.constant dense<0.000000e+00> : vector<2xf32>
    %117 = vector.multi_reduction <add>, %116, %cst_65 [1] : vector<2x32xf32> to vector<2xf32>
    %118 = vector.shape_cast %117 : vector<2xf32> to vector<2x1xf32>
    %c0_66 = arith.constant 0 : index
    %c0_67 = arith.constant 0 : index
    %119 = vector.load %arg24[%c0_66, %c0_67] : memref<1x16xf32, #tpu.memory_space<vmem>>, vector<1x16xf32>
    %120 = vector.broadcast %119 : vector<1x16xf32> to vector<2x16xf32>
    %121 = arith.mulf %113, %120 : vector<2x16xf32>
    %cst_68 = arith.constant dense<0.000000e+00> : vector<2xf32>
    %122 = vector.multi_reduction <add>, %121, %cst_68 [1] : vector<2x16xf32> to vector<2xf32>
    %123 = vector.shape_cast %122 : vector<2xf32> to vector<2x1xf32>
    %124 = arith.addf %118, %123 : vector<2x1xf32>
    %c0_69 = arith.constant 0 : index
    %c0_70 = arith.constant 0 : index
    %125 = vector.load %arg25[%c0_69, %c0_70] : memref<1x16xf32, #tpu.memory_space<vmem>>, vector<1x16xf32>
    %126 = vector.broadcast %125 : vector<1x16xf32> to vector<2x16xf32>
    %127 = arith.mulf %45, %126 : vector<2x16xf32>
    %cst_71 = arith.constant dense<0.000000e+00> : vector<2xf32>
    %128 = vector.multi_reduction <add>, %127, %cst_71 [1] : vector<2x16xf32> to vector<2xf32>
    %129 = vector.shape_cast %128 : vector<2xf32> to vector<2x1xf32>
    %130 = arith.addf %124, %129 : vector<2x1xf32>
    %c0_72 = arith.constant 0 : index
    %c0_73 = arith.constant 0 : index
    %131 = vector.load %arg26[%c0_72, %c0_73] : memref<1x16xf32, #tpu.memory_space<vmem>>, vector<1x16xf32>
    %132 = vector.broadcast %131 : vector<1x16xf32> to vector<2x16xf32>
    %133 = arith.mulf %43, %132 : vector<2x16xf32>
    %cst_74 = arith.constant dense<0.000000e+00> : vector<2xf32>
    %134 = vector.multi_reduction <add>, %133, %cst_74 [1] : vector<2x16xf32> to vector<2xf32>
    %135 = vector.shape_cast %134 : vector<2xf32> to vector<2x1xf32>
    %136 = arith.addf %130, %135 : vector<2x1xf32>
    %c0_75 = arith.constant 0 : index
    %c0_76 = arith.constant 0 : index
    %137 = vector.load %arg27[%c0_75, %c0_76] : memref<1x32xf32, #tpu.memory_space<vmem>>, vector<1x32xf32>
    %138 = vector.broadcast %137 : vector<1x32xf32> to vector<2x32xf32>
    %139 = arith.mulf %12, %138 : vector<2x32xf32>
    %cst_77 = arith.constant dense<0.000000e+00> : vector<2xf32>
    %140 = vector.multi_reduction <add>, %139, %cst_77 [1] : vector<2x32xf32> to vector<2xf32>
    %141 = vector.shape_cast %140 : vector<2xf32> to vector<2x1xf32>
    %142 = arith.addf %136, %141 : vector<2x1xf32>
    %c0_78 = arith.constant 0 : index
    %c0_79 = arith.constant 0 : index
    %143 = vector.load %arg28[%c0_78, %c0_79] : memref<1x1xf32, #tpu.memory_space<vmem>>, vector<1x1xf32>
    %144 = vector.broadcast %143 : vector<1x1xf32> to vector<2x1xf32>
    %145 = arith.addf %142, %144 : vector<2x1xf32>
    %146 = arith.negf %145 : vector<2x1xf32>
    %147 = math.exp %146 : vector<2x1xf32>
    %cst_80 = arith.constant 1.000000e+00 : f32
    %148 = vector.broadcast %cst_80 : f32 to vector<2x1xf32>
    %149 = arith.addf %148, %147 : vector<2x1xf32>
    %150 = arith.divf %148, %149 : vector<2x1xf32>
    %c0_81 = arith.constant 0 : index
    %c0_82 = arith.constant 0 : index
    %151 = vector.load %arg29[%c0_81, %c0_82] : memref<64x16xf32, #tpu.memory_space<vmem>>, vector<64x16xf32>
    %152 = vector.extract_strided_slice %151 {offsets = [0, 0], sizes = [16, 16], strides = [1, 1]} : vector<64x16xf32> to vector<16x16xf32>
    %cst_83 = arith.constant dense<0.000000e+00> : vector<2x16xf32>
    %153 = tpu.matmul %45, %152, %cst_83 {dimension_numbers = #tpu.dot_dimension_numbers<[1], [0], [0], [1], [0, 0, 1, 1], [], []>} : vector<2x16xf32>, vector<16x16xf32>, vector<2x16xf32> -> vector<2x16xf32>
    %154 = vector.extract_strided_slice %151 {offsets = [16, 0], sizes = [32, 16], strides = [1, 1]} : vector<64x16xf32> to vector<32x16xf32>
    %cst_84 = arith.constant dense<0.000000e+00> : vector<2x16xf32>
    %155 = tpu.matmul %78, %154, %cst_84 {dimension_numbers = #tpu.dot_dimension_numbers<[1], [0], [0], [1], [0, 0, 1, 1], [], []>} : vector<2x32xf32>, vector<32x16xf32>, vector<2x16xf32> -> vector<2x16xf32>
    %156 = arith.addf %153, %155 : vector<2x16xf32>
    %157 = vector.extract_strided_slice %151 {offsets = [48, 0], sizes = [16, 16], strides = [1, 1]} : vector<64x16xf32> to vector<16x16xf32>
    %cst_85 = arith.constant dense<0.000000e+00> : vector<2x16xf32>
    %158 = tpu.matmul %113, %157, %cst_85 {dimension_numbers = #tpu.dot_dimension_numbers<[1], [0], [0], [1], [0, 0, 1, 1], [], []>} : vector<2x16xf32>, vector<16x16xf32>, vector<2x16xf32> -> vector<2x16xf32>
    %159 = arith.addf %156, %158 : vector<2x16xf32>
    %c0_86 = arith.constant 0 : index
    %c0_87 = arith.constant 0 : index
    %160 = vector.load %arg30[%c0_86, %c0_87] : memref<1x16xf32, #tpu.memory_space<vmem>>, vector<1x16xf32>
    %161 = vector.broadcast %160 : vector<1x16xf32> to vector<2x16xf32>
    %162 = arith.addf %159, %161 : vector<2x16xf32>
    %c0_88 = arith.constant 0 : index
    %c0_89 = arith.constant 0 : index
    %163 = vector.load %arg19[%c0_88, %c0_89] : memref<16x16xf32, #tpu.memory_space<vmem>>, vector<16x16xf32>
    %cst_90 = arith.constant dense<0.000000e+00> : vector<2x16xf32>
    %164 = tpu.matmul %45, %163, %cst_90 {dimension_numbers = #tpu.dot_dimension_numbers<[1], [0], [0], [1], [0, 0, 1, 1], [], []>} : vector<2x16xf32>, vector<16x16xf32>, vector<2x16xf32> -> vector<2x16xf32>
    %c0_91 = arith.constant 0 : index
    %c0_92 = arith.constant 0 : index
    %165 = vector.load %arg31[%c0_91, %c0_92] : memref<2x16xf32, #tpu.memory_space<vmem>>, vector<2x16xf32>
    tpu.vector_store %arg31[%c0_91, %c0_92], %162 {strides = array<i32>} : memref<2x16xf32, #tpu.memory_space<vmem>>, vector<2x16xf32>,
    %c0_93 = arith.constant 0 : index
    %c0_94 = arith.constant 0 : index
    %166 = vector.load %arg32[%c0_93, %c0_94] : memref<2x1xf32, #tpu.memory_space<vmem>>, vector<2x1xf32>
    tpu.vector_store %arg32[%c0_93, %c0_94], %150 {strides = array<i32>} : memref<2x1xf32, #tpu.memory_space<vmem>>, vector<2x1xf32>,
    %cst_95 = arith.constant 1.000000e+00 : f32
    %167 = vector.broadcast %cst_95 : f32 to vector<2x1xf32>
    %168 = arith.subf %167, %150 : vector<2x1xf32>
    %169 = vector.broadcast %168 : vector<2x1xf32> to vector<2x8xf32>
    %170 = arith.mulf %169, %73 : vector<2x8xf32>
    %c0_96 = arith.constant 0 : index
    %c0_97 = arith.constant 0 : index
    %171 = vector.load %arg33[%c0_96, %c0_97] : memref<2x8xf32, #tpu.memory_space<vmem>>, vector<2x8xf32>
    tpu.vector_store %arg33[%c0_96, %c0_97], %170 {strides = array<i32>} : memref<2x8xf32, #tpu.memory_space<vmem>>, vector<2x8xf32>,
    %c0_98 = arith.constant 0 : index
    %c0_99 = arith.constant 0 : index
    %172 = vector.load %arg34[%c0_98, %c0_99] : memref<2x16xf32, #tpu.memory_space<vmem>>, vector<2x16xf32>
    tpu.vector_store %arg34[%c0_98, %c0_99], %45 {strides = array<i32>} : memref<2x16xf32, #tpu.memory_space<vmem>>, vector<2x16xf32>,
    %c0_100 = arith.constant 0 : index
    %c0_101 = arith.constant 0 : index
    %173 = vector.load %arg35[%c0_100, %c0_101] : memref<2x16xf32, #tpu.memory_space<vmem>>, vector<2x16xf32>
    tpu.vector_store %arg35[%c0_100, %c0_101], %43 {strides = array<i32>} : memref<2x16xf32, #tpu.memory_space<vmem>>, vector<2x16xf32>,
    %c0_102 = arith.constant 0 : index
    %c0_103 = arith.constant 0 : index
    %174 = vector.load %arg36[%c0_102, %c0_103] : memref<2x32xf32, #tpu.memory_space<vmem>>, vector<2x32xf32>
    tpu.vector_store %arg36[%c0_102, %c0_103], %78 {strides = array<i32>} : memref<2x32xf32, #tpu.memory_space<vmem>>, vector<2x32xf32>,
    %c0_104 = arith.constant 0 : index
    %c0_105 = arith.constant 0 : index
    %175 = vector.load %arg37[%c0_104, %c0_105] : memref<2x8xf32, #tpu.memory_space<vmem>>, vector<2x8xf32>
    tpu.vector_store %arg37[%c0_104, %c0_105], %67 {strides = array<i32>} : memref<2x8xf32, #tpu.memory_space<vmem>>, vector<2x8xf32>,
    %c0_106 = arith.constant 0 : index
    %c0_107 = arith.constant 0 : index
    %176 = vector.load %arg38[%c0_106, %c0_107] : memref<2x16xf32, #tpu.memory_space<vmem>>, vector<2x16xf32>
    tpu.vector_store %arg38[%c0_106, %c0_107], %164 {strides = array<i32>} : memref<2x16xf32, #tpu.memory_space<vmem>>, vector<2x16xf32>,
    return
  }
}

</mosaic_0001>

<llo_original>
// kernel: tpu_custom_call.1
$region0: #{tpu_custom_call.1}
  #allocation0 [shape = 'u32[]', space=smem, size = 0x4, offset = 0x4, fixed_abs, tag = 'smem constant byte address 0x4 - core index']
  #allocation1 [shape = 'u32[144,128]{1,0:T(1,128)}', space=vmem, size = 0x12000, scoped, tag = 'internal scratch']
  #allocation2 [shape = 's32[1]{0:T(128)S(6)}', space=smem, size = 0x200, scoped, tag = 'scoped memory for tpu_custom_call.1']
  #allocation3 [shape = 'f32[1,1]{1,0:T(1,128)S(1)}', space=vmem, size = 0x200, scoped, tag = 'scoped memory for tpu_custom_call.1']
  %s0 = inlined_call_operand.smem [shape: u32[39], index: -1, kind: input, shape index: {}]
  %s1 = sld [smem:[%s0]]
  %s2 = scalar_lea.smem %s0, 1
  %s3 = sld [smem:[%s2]]
  %s4 = scalar_lea.smem %s0, 2
  %s5 = sld [smem:[%s4]]
  %s6 = scalar_lea.smem %s0, 3
  %s7 = sld [smem:[%s6]]
  %s8 = scalar_lea.smem %s0, 4
  %s9 = sld [smem:[%s8]]
  %s10 = scalar_lea.smem %s0, 5
  %s11 = sld [smem:[%s10]]
  %s12 = scalar_lea.smem %s0, 6
  %s13 = sld [smem:[%s12]]
  %s14 = scalar_lea.smem %s0, 7
  %s15 = sld [smem:[%s14]]
  %s16 = scalar_lea.smem %s0, 8
  %s17 = sld [smem:[%s16]]
  %s18 = scalar_lea.smem %s0, 9
  %s19 = sld [smem:[%s18]]
  %s20 = scalar_lea.smem %s0, 10
  %s21 = sld [smem:[%s20]]
  %s22 = scalar_lea.smem %s0, 11
  %s23 = sld [smem:[%s22]]
  %s24 = scalar_lea.smem %s0, 12
  %s25 = sld [smem:[%s24]]
  %s26 = scalar_lea.smem %s0, 13
  %s27 = sld [smem:[%s26]]
  %s28 = scalar_lea.smem %s0, 14
  %s29 = sld [smem:[%s28]]
  %s30 = scalar_lea.smem %s0, 15
  %s31 = sld [smem:[%s30]]
  %s32 = scalar_lea.smem %s0, 16
  %s33 = sld [smem:[%s32]]
  %s34 = scalar_lea.smem %s0, 17
  %s35 = sld [smem:[%s34]]
  %s36 = scalar_lea.smem %s0, 18
  %s37 = sld [smem:[%s36]]
  %s38 = scalar_lea.smem %s0, 19
  %s39 = sld [smem:[%s38]]
  %s40 = scalar_lea.smem %s0, 20
  %s41 = sld [smem:[%s40]]
  %s42 = scalar_lea.smem %s0, 21
  %s43 = sld [smem:[%s42]]
  %s44 = scalar_lea.smem %s0, 22
  %s45 = sld [smem:[%s44]]
  %s46 = scalar_lea.smem %s0, 23
  %s47 = sld [smem:[%s46]]
  %s48 = scalar_lea.smem %s0, 24
  %s49 = sld [smem:[%s48]]
  %s50 = scalar_lea.smem %s0, 25
  %s51 = sld [smem:[%s50]]
  %s52 = scalar_lea.smem %s0, 26
  %s53 = sld [smem:[%s52]]
  %s54 = scalar_lea.smem %s0, 27
  %s55 = sld [smem:[%s54]]
  %s56 = scalar_lea.smem %s0, 28
  %s57 = sld [smem:[%s56]]
  %s58 = scalar_lea.smem %s0, 29
  %s59 = sld [smem:[%s58]]
  %s60 = scalar_lea.smem %s0, 30
  %s61 = sld [smem:[%s60]]
  %s62 = scalar_lea.smem %s0, 31
  %s63 = sld [smem:[%s62]]
  %s64 = scalar_lea.smem %s0, 32
  %s65 = sld [smem:[%s64]]
  %s66 = scalar_lea.smem %s0, 33
  %s67 = sld [smem:[%s66]]
  %s68 = scalar_lea.smem %s0, 34
  %s69 = sld [smem:[%s68]]
  %s70 = scalar_lea.smem %s0, 35
  %s71 = sld [smem:[%s70]]
  %s72 = scalar_lea.smem %s0, 36
  %s73 = sld [smem:[%s72]]
  %s74 = scalar_lea.smem %s0, 37
  %s75 = sld [smem:[%s74]]
  %s76 = scalar_lea.smem %s0, 38
  %s77 = sld [smem:[%s76]]
  %78 = xla_tuple %s63, %s65, %s67, %s69, %s71, %s73, %s75, %s77
  %s79 = sld [smem:[#allocation0]]
  $region238: #{tpu_custom_call.1} parent=0
    _
  %s81 = ssub.s32 1, %s79
  %s82 = scalar_select 0, %s81, %s79
  %83 = sst [smem:[#allocation2]] %s21
  %v84 = vstv %s57
  %85 = vst [vmem:[#allocation3] sm:$0x1] %v84
  $region1: #{tpu_custom_call.1} parent=0
    #allocation4 [shape = 'u8[512]{0}', space=vmem, size = 0x400, scoped, tag = 'input window, operand 12, single buffered']
    #allocation5 [shape = 's32[1]{0}', space=sflag, size = 0x4, scoped, tag = 'scoped memory for tpu_custom_call.1']
    #allocation6 [shape = 's32[1]{0}', space=sflag, size = 0x4, scoped, tag = 'scoped memory for tpu_custom_call.1']
    #allocation7 [shape = 'u8[512]{0}', space=vmem, size = 0x400, scoped, tag = 'input window, operand 15, single buffered']
    #allocation8 [shape = 's32[1]{0}', space=sflag, size = 0x4, scoped, tag = 'scoped memory for tpu_custom_call.1']
    #allocation9 [shape = 'u8[512]{0}', space=vmem, size = 0x400, scoped, tag = 'input window, operand 17, single buffered']
    #allocation10 [shape = 'u8[512]{0}', space=vmem, size = 0x400, scoped, tag = 'input window, operand 18, single buffered']
    #allocation11 [shape = 's32[1]{0}', space=sflag, size = 0x4, scoped, tag = 'scoped memory for tpu_custom_call.1']
    #allocation12 [shape = 'u8[512]{0}', space=vmem, size = 0x400, scoped, tag = 'input window, operand 21, single buffered']
    #allocation13 [shape = 'u8[512]{0}', space=vmem, size = 0x400, scoped, tag = 'input window, operand 22, single buffered']
    #allocation14 [shape = 's32[1]{0}', space=sflag, size = 0x4, scoped, tag = 'scoped memory for tpu_custom_call.1']
    #allocation15 [shape = 'u8[512]{0}', space=vmem, size = 0x400, scoped, tag = 'input window, operand 23, single buffered']
    #allocation16 [shape = 'u8[512]{0}', space=vmem, size = 0x400, scoped, tag = 'input window, operand 24, single buffered']
    #allocation17 [shape = 's32[1]{0}', space=sflag, size = 0x4, scoped, tag = 'scoped memory for tpu_custom_call.1']
    #allocation18 [shape = 'u8[512]{0}', space=vmem, size = 0x400, scoped, tag = 'input window, operand 25, single buffered']
    #allocation19 [shape = 'u8[512]{0}', space=vmem, size = 0x400, scoped, tag = 'input window, operand 26, single buffered']
    #allocation20 [shape = 's32[1]{0}', space=sflag, size = 0x4, scoped, tag = 'scoped memory for tpu_custom_call.1']
    #allocation21 [shape = 'u8[512]{0}', space=vmem, size = 0x400, scoped, tag = 'input window, operand 27, single buffered']
    #allocation22 [shape = 'u8[512]{0}', space=vmem, size = 0x400, scoped, tag = 'input window, operand 30, single buffered']
    #allocation23 [shape = 's32[1]{0}', space=sflag, size = 0x4, scoped, tag = 'scoped memory for tpu_custom_call.1']
    #allocation24 [shape = 'u8[1024]{0}', space=vmem, size = 0x400, scoped, tag = 'output window, operand 0, single buffered']
    #allocation25 [shape = 'u8[1024]{0}', space=vmem, size = 0x400, scoped, tag = 'output window, operand 2, single buffered']
    #allocation26 [shape = 's32[1]{0}', space=sflag, size = 0x4, scoped, tag = 'scoped memory for tpu_custom_call.1']
    #allocation27 [shape = 'u8[1024]{0}', space=vmem, size = 0x400, scoped, tag = 'output window, operand 3, single buffered']
    #allocation28 [shape = 'u8[1024]{0}', space=vmem, size = 0x400, scoped, tag = 'output window, operand 4, single buffered']
    #allocation29 [shape = 's32[1]{0}', space=sflag, size = 0x4, scoped, tag = 'scoped memory for tpu_custom_call.1']
    #allocation30 [shape = 'u8[1024]{0}', space=vmem, size = 0x400, scoped, tag = 'output window, operand 5, single buffered']
    #allocation31 [shape = 'u8[1024]{0}', space=vmem, size = 0x400, scoped, tag = 'output window, operand 7, single buffered']
    #allocation32 [shape = 's32[1]{0}', space=sflag, size = 0x4, scoped, tag = 'scoped memory for tpu_custom_call.1']
    %86 = vsyncpa [#allocation5], 0
    %87 = vsyncpa [#allocation8], 0
    %88 = vsyncpa [#allocation11], 0
    %89 = vsyncpa [#allocation14], 0
    %90 = vsyncpa [#allocation17], 0
    %91 = vsyncpa [#allocation20], 0
    %92 = vsyncpa [#allocation23], 0
    %93 = vsyncpa [#allocation6], 0
    %94 = vsyncpa [#allocation26], 0
    %95 = vsyncpa [#allocation29], 0
    %96 = vsyncpa [#allocation32], 0
    // Predicated region
    $region2: #{tpu_custom_call.1} parent=1 // pred_check
      _
    $region3: #{tpu_custom_call.1} parent=1 // pred_check_branch
      %98 = sbr.rel (0) target = $region5
    $region4: #{tpu_custom_call.1} parent=1 // pred_region
      _
    $region5: #{tpu_custom_call.1} parent=1 // pred_fallthru
      _
    // Predicated region
    $region6: #{tpu_custom_call.1} parent=1 // pred_check
      _
    $region7: #{tpu_custom_call.1} parent=1 // pred_check_branch
      %100 = sbr.rel (0) target = $region9
    $region8: #{tpu_custom_call.1} parent=1 // pred_region
      _
    $region9: #{tpu_custom_call.1} parent=1 // pred_fallthru
      _
    // Predicated region
    $region10: #{tpu_custom_call.1} parent=1 // pred_check
      _
    $region11: #{tpu_custom_call.1} parent=1 // pred_check_branch
      %102 = sbr.rel (0) target = $region13
    $region12: #{tpu_custom_call.1} parent=1 // pred_region
      _
    $region13: #{tpu_custom_call.1} parent=1 // pred_fallthru
      _
    // Predicated region
    $region14: #{tpu_custom_call.1} parent=1 // pred_check
      _
    $region15: #{tpu_custom_call.1} parent=1 // pred_check_branch
      %104 = sbr.rel (0) target = $region17
    $region16: #{tpu_custom_call.1} parent=1 // pred_region
      _
    $region17: #{tpu_custom_call.1} parent=1 // pred_fallthru
      _
    // Predicated region
    $region18: #{tpu_custom_call.1} parent=1 // pred_check
      _
    $region19: #{tpu_custom_call.1} parent=1 // pred_check_branch
      %106 = sbr.rel (0) target = $region21
    $region20: #{tpu_custom_call.1} parent=1 // pred_region
      _
    $region21: #{tpu_custom_call.1} parent=1 // pred_fallthru
      _
    // Predicated region
    $region22: #{tpu_custom_call.1} parent=1 // pred_check
      _
    $region23: #{tpu_custom_call.1} parent=1 // pred_check_branch
      %108 = sbr.rel (0) target = $region25
    $region24: #{tpu_custom_call.1} parent=1 // pred_region
      _
    $region25: #{tpu_custom_call.1} parent=1 // pred_fallthru
      _
    // Predicated region
    $region26: #{tpu_custom_call.1} parent=1 // pred_check
      _
    $region27: #{tpu_custom_call.1} parent=1 // pred_check_branch
      %110 = sbr.rel (0) target = $region29
    $region28: #{tpu_custom_call.1} parent=1 // pred_region
      _
    $region29: #{tpu_custom_call.1} parent=1 // pred_fallthru
      _
    // Predicated region
    $region30: #{tpu_custom_call.1} parent=1 // pred_check
      _
    $region31: #{tpu_custom_call.1} parent=1 // pred_check_branch
      %112 = sbr.rel (0) target = $region33
    $region32: #{tpu_custom_call.1} parent=1 // pred_region
      _
    $region33: #{tpu_custom_call.1} parent=1 // pred_fallthru
      _
    // Predicated region
    $region34: #{tpu_custom_call.1} parent=1 // pred_check
      _
    $region35: #{tpu_custom_call.1} parent=1 // pred_check_branch
      %114 = sbr.rel (0) target = $region37
    $region36: #{tpu_custom_call.1} parent=1 // pred_region
      _
    $region37: #{tpu_custom_call.1} parent=1 // pred_fallthru
      _
    // Predicated region
    $region38: #{tpu_custom_call.1} parent=1 // pred_check
      _
    $region39: #{tpu_custom_call.1} parent=1 // pred_check_branch
      %116 = sbr.rel (0) target = $region41
    $region40: #{tpu_custom_call.1} parent=1 // pred_region
      _
    $region41: #{tpu_custom_call.1} parent=1 // pred_fallthru
      _
    // Predicated region
    $region42: #{tpu_custom_call.1} parent=1 // pred_check
      _
    $region43: #{tpu_custom_call.1} parent=1 // pred_check_branch
      %118 = sbr.rel (0) target = $region45
    $region44: #{tpu_custom_call.1} parent=1 // pred_region
      _
    $region45: #{tpu_custom_call.1} parent=1 // pred_fallthru
      _
    // Predicated region
    $region46: #{tpu_custom_call.1} parent=1 // pred_check
      _
    $region47: #{tpu_custom_call.1} parent=1 // pred_check_branch
      %120 = sbr.rel (0) target = $region49
    $region48: #{tpu_custom_call.1} parent=1 // pred_region
      _
    $region49: #{tpu_custom_call.1} parent=1 // pred_fallthru
      _
    // Predicated region
    $region50: #{tpu_custom_call.1} parent=1 // pred_check
      _
    $region51: #{tpu_custom_call.1} parent=1 // pred_check_branch
      %122 = sbr.rel (0) target = $region53
    $region52: #{tpu_custom_call.1} parent=1 // pred_region
      %s124 = ssub.s32 16, 16
      %125 = vsyncadd [#allocation5], %s124
      %s127 = sshll.u32 [#allocation4], 4
      %s128 = int_to_ptr.vmem [resolvable:$true] %s127
      %130 = dma.hbm_to_vmem [thread:$0]  %s25, 16, %s128, [#allocation5]
    $region53: #{tpu_custom_call.1} parent=1 // pred_fallthru
      _
    // Predicated region
    $region54: #{tpu_custom_call.1} parent=1 // pred_check
      _
    $region55: #{tpu_custom_call.1} parent=1 // pred_check_branch
      %132 = sbr.rel (0) target = $region57
    $region56: #{tpu_custom_call.1} parent=1 // pred_region
      _
    $region57: #{tpu_custom_call.1} parent=1 // pred_fallthru
      _
    // Predicated region
    $region58: #{tpu_custom_call.1} parent=1 // pred_check
      _
    $region59: #{tpu_custom_call.1} parent=1 // pred_check_branch
      %134 = sbr.rel (0) target = $region61
    $region60: #{tpu_custom_call.1} parent=1 // pred_region
      _
    $region61: #{tpu_custom_call.1} parent=1 // pred_fallthru
      _
    // Predicated region
    $region62: #{tpu_custom_call.1} parent=1 // pred_check
      _
    $region63: #{tpu_custom_call.1} parent=1 // pred_check_branch
      %136 = sbr.rel (0) target = $region65
    $region64: #{tpu_custom_call.1} parent=1 // pred_region
      %s138 = ssub.s32 16, 16
      %139 = vsyncadd [#allocation8], %s138
      %s141 = sshll.u32 [#allocation7], 4
      %s142 = int_to_ptr.vmem [resolvable:$true] %s141
      %144 = dma.hbm_to_vmem [thread:$0]  %s31, 16, %s142, [#allocation8]
    $region65: #{tpu_custom_call.1} parent=1 // pred_fallthru
      _
    // Predicated region
    $region66: #{tpu_custom_call.1} parent=1 // pred_check
      _
    $region67: #{tpu_custom_call.1} parent=1 // pred_check_branch
      %146 = sbr.rel (0) target = $region69
    $region68: #{tpu_custom_call.1} parent=1 // pred_region
      _
    $region69: #{tpu_custom_call.1} parent=1 // pred_fallthru
      _
    // Predicated region
    $region70: #{tpu_custom_call.1} parent=1 // pred_check
      _
    $region71: #{tpu_custom_call.1} parent=1 // pred_check_branch
      %148 = sbr.rel (0) target = $region73
    $region72: #{tpu_custom_call.1} parent=1 // pred_region
      %s150 = ssub.s32 16, 16
      %151 = vsyncadd [#allocation8], %s150
      %s153 = sshll.u32 [#allocation9], 4
      %s154 = int_to_ptr.vmem [resolvable:$true] %s153
      %156 = dma.hbm_to_vmem [thread:$0]  %s35, 16, %s154, [#allocation8]
    $region73: #{tpu_custom_call.1} parent=1 // pred_fallthru
      _
    // Predicated region
    $region74: #{tpu_custom_call.1} parent=1 // pred_check
      _
    $region75: #{tpu_custom_call.1} parent=1 // pred_check_branch
      %158 = sbr.rel (0) target = $region77
    $region76: #{tpu_custom_call.1} parent=1 // pred_region
      %s160 = ssub.s32 16, 16
      %161 = vsyncadd [#allocation11], %s160
      %s163 = sshll.u32 [#allocation10], 4
      %s164 = int_to_ptr.vmem [resolvable:$true] %s163
      %166 = dma.hbm_to_vmem [thread:$0]  %s37, 16, %s164, [#allocation11]
    $region77: #{tpu_custom_call.1} parent=1 // pred_fallthru
      _
    // Predicated region
    $region78: #{tpu_custom_call.1} parent=1 // pred_check
      _
    $region79: #{tpu_custom_call.1} parent=1 // pred_check_branch
      %168 = sbr.rel (0) target = $region81
    $region80: #{tpu_custom_call.1} parent=1 // pred_region
      _
    $region81: #{tpu_custom_call.1} parent=1 // pred_fallthru
      _
    // Predicated region
    $region82: #{tpu_custom_call.1} parent=1 // pred_check
      _
    $region83: #{tpu_custom_call.1} parent=1 // pred_check_branch
      %170 = sbr.rel (0) target = $region85
    $region84: #{tpu_custom_call.1} parent=1 // pred_region
      _
    $region85: #{tpu_custom_call.1} parent=1 // pred_fallthru
      _
    // Predicated region
    $region86: #{tpu_custom_call.1} parent=1 // pred_check
      _
    $region87: #{tpu_custom_call.1} parent=1 // pred_check_branch
      %172 = sbr.rel (0) target = $region89
    $region88: #{tpu_custom_call.1} parent=1 // pred_region
      %s174 = ssub.s32 16, 16
      %175 = vsyncadd [#allocation11], %s174
      %s177 = sshll.u32 [#allocation12], 4
      %s178 = int_to_ptr.vmem [resolvable:$true] %s177
      %180 = dma.hbm_to_vmem [thread:$0]  %s43, 16, %s178, [#allocation11]
    $region89: #{tpu_custom_call.1} parent=1 // pred_fallthru
      _
    // Predicated region
    $region90: #{tpu_custom_call.1} parent=1 // pred_check
      _
    $region91: #{tpu_custom_call.1} parent=1 // pred_check_branch
      %182 = sbr.rel (0) target = $region93
    $region92: #{tpu_custom_call.1} parent=1 // pred_region
      %s184 = ssub.s32 16, 16
      %185 = vsyncadd [#allocation14], %s184
      %s187 = sshll.u32 [#allocation13], 4
      %s188 = int_to_ptr.vmem [resolvable:$true] %s187
      %190 = dma.hbm_to_vmem [thread:$0]  %s45, 16, %s188, [#allocation14]
    $region93: #{tpu_custom_call.1} parent=1 // pred_fallthru
      _
    // Predicated region
    $region94: #{tpu_custom_call.1} parent=1 // pred_check
      _
    $region95: #{tpu_custom_call.1} parent=1 // pred_check_branch
      %192 = sbr.rel (0) target = $region97
    $region96: #{tpu_custom_call.1} parent=1 // pred_region
      %s194 = ssub.s32 16, 16
      %195 = vsyncadd [#allocation14], %s194
      %s197 = sshll.u32 [#allocation15], 4
      %s198 = int_to_ptr.vmem [resolvable:$true] %s197
      %200 = dma.hbm_to_vmem [thread:$0]  %s47, 16, %s198, [#allocation14]
    $region97: #{tpu_custom_call.1} parent=1 // pred_fallthru
      _
    // Predicated region
    $region98: #{tpu_custom_call.1} parent=1 // pred_check
      _
    $region99: #{tpu_custom_call.1} parent=1 // pred_check_branch
      %202 = sbr.rel (0) target = $region101
    $region100: #{tpu_custom_call.1} parent=1 // pred_region
      %s204 = ssub.s32 16, 16
      %205 = vsyncadd [#allocation17], %s204
      %s207 = sshll.u32 [#allocation16], 4
      %s208 = int_to_ptr.vmem [resolvable:$true] %s207
      %210 = dma.hbm_to_vmem [thread:$0]  %s49, 16, %s208, [#allocation17]
    $region101: #{tpu_custom_call.1} parent=1 // pred_fallthru
      _
    // Predicated region
    $region102: #{tpu_custom_call.1} parent=1 // pred_check
      _
    $region103: #{tpu_custom_call.1} parent=1 // pred_check_branch
      %212 = sbr.rel (0) target = $region105
    $region104: #{tpu_custom_call.1} parent=1 // pred_region
      %s214 = ssub.s32 16, 16
      %215 = vsyncadd [#allocation17], %s214
      %s217 = sshll.u32 [#allocation18], 4
      %s218 = int_to_ptr.vmem [resolvable:$true] %s217
      %220 = dma.hbm_to_vmem [thread:$0]  %s51, 16, %s218, [#allocation17]
    $region105: #{tpu_custom_call.1} parent=1 // pred_fallthru
      _
    // Predicated region
    $region106: #{tpu_custom_call.1} parent=1 // pred_check
      _
    $region107: #{tpu_custom_call.1} parent=1 // pred_check_branch
      %222 = sbr.rel (0) target = $region109
    $region108: #{tpu_custom_call.1} parent=1 // pred_region
      %s224 = ssub.s32 16, 16
      %225 = vsyncadd [#allocation20], %s224
      %s227 = sshll.u32 [#allocation19], 4
      %s228 = int_to_ptr.vmem [resolvable:$true] %s227
      %230 = dma.hbm_to_vmem [thread:$0]  %s53, 16, %s228, [#allocation20]
    $region109: #{tpu_custom_call.1} parent=1 // pred_fallthru
      _
    // Predicated region
    $region110: #{tpu_custom_call.1} parent=1 // pred_check
      _
    $region111: #{tpu_custom_call.1} parent=1 // pred_check_branch
      %232 = sbr.rel (0) target = $region113
    $region112: #{tpu_custom_call.1} parent=1 // pred_region
      %s234 = ssub.s32 16, 16
      %235 = vsyncadd [#allocation20], %s234
      %s237 = sshll.u32 [#allocation21], 4
      %s238 = int_to_ptr.vmem [resolvable:$true] %s237
      %240 = dma.hbm_to_vmem [thread:$0]  %s55, 16, %s238, [#allocation20]
    $region113: #{tpu_custom_call.1} parent=1 // pred_fallthru
      _
    // Predicated region
    $region114: #{tpu_custom_call.1} parent=1 // pred_check
      _
    $region115: #{tpu_custom_call.1} parent=1 // pred_check_branch
      %242 = sbr.rel (0) target = $region117
    $region116: #{tpu_custom_call.1} parent=1 // pred_region
      _
    $region117: #{tpu_custom_call.1} parent=1 // pred_fallthru
      _
    // Predicated region
    $region118: #{tpu_custom_call.1} parent=1 // pred_check
      _
    $region119: #{tpu_custom_call.1} parent=1 // pred_check_branch
      %244 = sbr.rel (0) target = $region121
    $region120: #{tpu_custom_call.1} parent=1 // pred_region
      _
    $region121: #{tpu_custom_call.1} parent=1 // pred_fallthru
      _
    // Predicated region
    $region122: #{tpu_custom_call.1} parent=1 // pred_check
      _
    $region123: #{tpu_custom_call.1} parent=1 // pred_check_branch
      %246 = sbr.rel (0) target = $region125
    $region124: #{tpu_custom_call.1} parent=1 // pred_region
      %s248 = ssub.s32 16, 16
      %249 = vsyncadd [#allocation23], %s248
      %s251 = sshll.u32 [#allocation22], 4
      %s252 = int_to_ptr.vmem [resolvable:$true] %s251
      %254 = dma.hbm_to_vmem [thread:$0]  %s61, 16, %s252, [#allocation23]
    $region125: #{tpu_custom_call.1} parent=1 // pred_fallthru
      _
    // Predicated region
    $region126: #{tpu_custom_call.1} parent=1 // pred_check
      _
    $region127: #{tpu_custom_call.1} parent=1 // pred_check_branch
      %256 = sbr.rel (0) target = $region129
    $region128: #{tpu_custom_call.1} parent=1 // pred_region
      %257 = dma.done [#allocation5], 16
    $region129: #{tpu_custom_call.1} parent=1 // pred_fallthru
      _
    // Predicated region
    $region130: #{tpu_custom_call.1} parent=1 // pred_check
      _
    $region131: #{tpu_custom_call.1} parent=1 // pred_check_branch
      %259 = sbr.rel (0) target = $region133
    $region132: #{tpu_custom_call.1} parent=1 // pred_region
      %260 = dma.done [#allocation8], 16
    $region133: #{tpu_custom_call.1} parent=1 // pred_fallthru
      _
    // Predicated region
    $region134: #{tpu_custom_call.1} parent=1 // pred_check
      _
    $region135: #{tpu_custom_call.1} parent=1 // pred_check_branch
      %262 = sbr.rel (0) target = $region137
    $region136: #{tpu_custom_call.1} parent=1 // pred_region
      %263 = dma.done [#allocation8], 16
    $region137: #{tpu_custom_call.1} parent=1 // pred_fallthru
      _
    // Predicated region
    $region138: #{tpu_custom_call.1} parent=1 // pred_check
      _
    $region139: #{tpu_custom_call.1} parent=1 // pred_check_branch
      %265 = sbr.rel (0) target = $region141
    $region140: #{tpu_custom_call.1} parent=1 // pred_region
      %266 = dma.done [#allocation11], 16
    $region141: #{tpu_custom_call.1} parent=1 // pred_fallthru
      _
    // Predicated region
    $region142: #{tpu_custom_call.1} parent=1 // pred_check
      _
    $region143: #{tpu_custom_call.1} parent=1 // pred_check_branch
      %268 = sbr.rel (0) target = $region145
    $region144: #{tpu_custom_call.1} parent=1 // pred_region
      %269 = dma.done [#allocation11], 16
    $region145: #{tpu_custom_call.1} parent=1 // pred_fallthru
      _
    // Predicated region
    $region146: #{tpu_custom_call.1} parent=1 // pred_check
      _
    $region147: #{tpu_custom_call.1} parent=1 // pred_check_branch
      %271 = sbr.rel (0) target = $region149
    $region148: #{tpu_custom_call.1} parent=1 // pred_region
      %272 = dma.done [#allocation14], 16
    $region149: #{tpu_custom_call.1} parent=1 // pred_fallthru
      _
    // Predicated region
    $region150: #{tpu_custom_call.1} parent=1 // pred_check
      _
    $region151: #{tpu_custom_call.1} parent=1 // pred_check_branch
      %274 = sbr.rel (0) target = $region153
    $region152: #{tpu_custom_call.1} parent=1 // pred_region
      %275 = dma.done [#allocation14], 16
    $region153: #{tpu_custom_call.1} parent=1 // pred_fallthru
      _
    // Predicated region
    $region154: #{tpu_custom_call.1} parent=1 // pred_check
      _
    $region155: #{tpu_custom_call.1} parent=1 // pred_check_branch
      %277 = sbr.rel (0) target = $region157
    $region156: #{tpu_custom_call.1} parent=1 // pred_region
      %278 = dma.done [#allocation17], 16
    $region157: #{tpu_custom_call.1} parent=1 // pred_fallthru
      _
    // Predicated region
    $region158: #{tpu_custom_call.1} parent=1 // pred_check
      _
    $region159: #{tpu_custom_call.1} parent=1 // pred_check_branch
      %280 = sbr.rel (0) target = $region161
    $region160: #{tpu_custom_call.1} parent=1 // pred_region
      %281 = dma.done [#allocation17], 16
    $region161: #{tpu_custom_call.1} parent=1 // pred_fallthru
      _
    // Predicated region
    $region162: #{tpu_custom_call.1} parent=1 // pred_check
      _
    $region163: #{tpu_custom_call.1} parent=1 // pred_check_branch
      %283 = sbr.rel (0) target = $region165
    $region164: #{tpu_custom_call.1} parent=1 // pred_region
      %284 = dma.done [#allocation20], 16
    $region165: #{tpu_custom_call.1} parent=1 // pred_fallthru
      _
    // Predicated region
    $region166: #{tpu_custom_call.1} parent=1 // pred_check
      _
    $region167: #{tpu_custom_call.1} parent=1 // pred_check_branch
      %286 = sbr.rel (0) target = $region169
    $region168: #{tpu_custom_call.1} parent=1 // pred_region
      %287 = dma.done [#allocation20], 16
    $region169: #{tpu_custom_call.1} parent=1 // pred_fallthru
      _
    // Predicated region
    $region170: #{tpu_custom_call.1} parent=1 // pred_check
      _
    $region171: #{tpu_custom_call.1} parent=1 // pred_check_branch
      %289 = sbr.rel (0) target = $region173
    $region172: #{tpu_custom_call.1} parent=1 // pred_region
      %290 = dma.done [#allocation23], 16
    $region173: #{tpu_custom_call.1} parent=1 // pred_fallthru
      _
    %v291 = vld [vmem:[%s1] sm:$0x3]
    %v292 = vld [vmem:[%s3] sm:$0x3]
    %v293 = vld [vmem:[%s5] sm:$0x3]
    %v294 = vld [vmem:[%s13] sm:$0x3]
    %v295 = vld [vmem:[%s23] sm:$0xff]
    %v296 = vld [vmem:[%s23 + $0x8] sm:$0xff]
    %v297 = vld [vmem:[%s23 + $0x10] sm:$0xff]
    %v298 = vld [vmem:[%s23 + $0x18] sm:$0xff]
    %v299 = vld [vmem:[%s23 + $0x20] sm:$0xff]
    %v300 = vld [vmem:[%s23 + $0x28] sm:$0xff]
    %v301 = vld [vmem:[%s23 + $0x30] sm:$0xff]
    %v302 = vld [vmem:[%s23 + $0x38] sm:$0xff]
    %vm303 = vcmask 261120
    %v305 = vsel %vm303, %v294, 0
    %307 = vmatprep.subr.mxu0 0.0
    %308 = vmatpush1.msra.mxu0 0.0
    %309 = vmatprep.subr.mxu0 0.0
    %310 = vmatpush1.msra.mxu0 0.0
    %311 = vmatprep.subr.mxu0 0.0
    %312 = vmatpush1.msra.mxu0 0.0
    %313 = vmatprep.subr.mxu0 0.0
    %314 = vmatpush1.msra.mxu0 0.0
    %315 = vmatprep.subr.mxu0 0.0
    %316 = vmatpush1.msra.mxu0 0.0
    %317 = vmatprep.subr.mxu0 0.0
    %318 = vmatpush1.msra.mxu0 0.0
    %319 = vmatprep.subr.mxu0 0.0
    %320 = vmatpush1.msra.mxu0 0.0
    %321 = vmatprep.subr.mxu0 0.0
    %322 = vmatpush1.msra.mxu0 0.0
    %323 = vmatprep.subr.mxu0 0.0
    %324 = vmatpush1.msra.mxu0 0.0
    %325 = vmatprep.subr.mxu0 0.0
    %326 = vmatpush1.msra.mxu0 0.0
    %327 = vmatprep.subr.mxu0 0.0
    %328 = vmatpush1.msra.mxu0 0.0
    %329 = vmatprep.subr.mxu0 0.0
    %330 = vmatpush1.msra.mxu0 0.0
    %331 = vmatprep.subr.mxu0 0.0
    %332 = vmatpush1.msra.mxu0 %v302
    %333 = vmatprep.subr.mxu0 0.0
    %334 = vmatpush1.msra.mxu0 %v301
    %335 = vmatprep.subr.mxu0 0.0
    %336 = vmatpush1.msra.mxu0 %v300
    %337 = vmatprep.subr.mxu0 0.0
    %338 = vmatpush1.msra.mxu0 %v299
    %339 = vmatprep.subr.mxu0 0.0
    %340 = vmatpush2.msra.mxu0 0.0
    %341 = vmatprep.subr.mxu0 0.0
    %342 = vmatpush2.msra.mxu0 0.0
    %343 = vmatprep.subr.mxu0 0.0
    %344 = vmatpush2.msra.mxu0 0.0
    %345 = vmatprep.subr.mxu0 0.0
    %346 = vmatpush2.msra.mxu0 0.0
    %347 = vmatprep.subr.mxu0 0.0
    %348 = vmatpush2.msra.mxu0 0.0
    %349 = vmatprep.subr.mxu0 0.0
    %350 = vmatpush2.msra.mxu0 0.0
    %351 = vmatprep.subr.mxu0 0.0
    %352 = vmatpush2.msra.mxu0 0.0
    %353 = vmatprep.subr.mxu0 0.0
    %354 = vmatpush2.msra.mxu0 0.0
    %355 = vmatprep.subr.mxu0 0.0
    %356 = vmatpush2.msra.mxu0 0.0
    %357 = vmatprep.subr.mxu0 0.0
    %358 = vmatpush2.msra.mxu0 0.0
    %359 = vmatprep.subr.mxu0 0.0
    %360 = vmatpush2.msra.mxu0 0.0
    %361 = vmatprep.subr.mxu0 0.0
    %362 = vmatpush2.msra.mxu0 0.0
    %363 = vmatprep.subr.mxu0 0.0
    %364 = vmatpush2.msra.mxu0 0.0
    %365 = vmatprep.subr.mxu0 0.0
    %366 = vmatpush2.msra.mxu0 0.0
    %367 = vmatprep.subr.mxu0 0.0
    %368 = vmatpush2.msra.mxu0 0.0
    %369 = vmatprep.subr.mxu0 0.0
    %370 = vmatpush2.msra.mxu0 0.0
    %371 = vmatprep.mubr.f32.mxu0 0.0
    %372 = vmatmul.mubr.f32.gmra.mxu0 %v305
    %v373 = vpop.f32.mrf.mxu0
    %v374 = vadd.f32 0.0, %v373
    %v375 = vpop.f32.mrf.mxu0
    %376 = vdwg.mxu0
    %v378 = vsel %vm303, %v291, 0
    %380 = vmatprep.subr.mxu0 0.0
    %381 = vmatpush1.msra.mxu0 0.0
    %382 = vmatprep.subr.mxu0 0.0
    %383 = vmatpush1.msra.mxu0 0.0
    %384 = vmatprep.subr.mxu0 0.0
    %385 = vmatpush1.msra.mxu0 0.0
    %386 = vmatprep.subr.mxu0 0.0
    %387 = vmatpush1.msra.mxu0 0.0
    %388 = vmatprep.subr.mxu0 0.0
    %389 = vmatpush1.msra.mxu0 0.0
    %390 = vmatprep.subr.mxu0 0.0
    %391 = vmatpush1.msra.mxu0 0.0
    %392 = vmatprep.subr.mxu0 0.0
    %393 = vmatpush1.msra.mxu0 0.0
    %394 = vmatprep.subr.mxu0 0.0
    %395 = vmatpush1.msra.mxu0 0.0
    %396 = vmatprep.subr.mxu0 0.0
    %397 = vmatpush1.msra.mxu0 0.0
    %398 = vmatprep.subr.mxu0 0.0
    %399 = vmatpush1.msra.mxu0 0.0
    %400 = vmatprep.subr.mxu0 0.0
    %401 = vmatpush1.msra.mxu0 0.0
    %402 = vmatprep.subr.mxu0 0.0
    %403 = vmatpush1.msra.mxu0 0.0
    %404 = vmatprep.subr.mxu0 0.0
    %405 = vmatpush1.msra.mxu0 %v298
    %406 = vmatprep.subr.mxu0 0.0
    %407 = vmatpush1.msra.mxu0 %v297
    %408 = vmatprep.subr.mxu0 0.0
    %409 = vmatpush1.msra.mxu0 %v296
    %410 = vmatprep.subr.mxu0 0.0
    %411 = vmatpush1.msra.mxu0 %v295
    %412 = vmatprep.subr.mxu0 0.0
    %413 = vmatpush2.msra.mxu0 0.0
    %414 = vmatprep.subr.mxu0 0.0
    %415 = vmatpush2.msra.mxu0 0.0
    %416 = vmatprep.subr.mxu0 0.0
    %417 = vmatpush2.msra.mxu0 0.0
    %418 = vmatprep.subr.mxu0 0.0
    %419 = vmatpush2.msra.mxu0 0.0
    %420 = vmatprep.subr.mxu0 0.0
    %421 = vmatpush2.msra.mxu0 0.0
    %422 = vmatprep.subr.mxu0 0.0
    %423 = vmatpush2.msra.mxu0 0.0
    %424 = vmatprep.subr.mxu0 0.0
    %425 = vmatpush2.msra.mxu0 0.0
    %426 = vmatprep.subr.mxu0 0.0
    %427 = vmatpush2.msra.mxu0 0.0
    %428 = vmatprep.subr.mxu0 0.0
    %429 = vmatpush2.msra.mxu0 0.0
    %430 = vmatprep.subr.mxu0 0.0
    %431 = vmatpush2.msra.mxu0 0.0
    %432 = vmatprep.subr.mxu0 0.0
    %433 = vmatpush2.msra.mxu0 0.0
    %434 = vmatprep.subr.mxu0 0.0
    %435 = vmatpush2.msra.mxu0 0.0
    %436 = vmatprep.subr.mxu0 0.0
    %437 = vmatpush2.msra.mxu0 0.0
    %438 = vmatprep.subr.mxu0 0.0
    %439 = vmatpush2.msra.mxu0 0.0
    %440 = vmatprep.subr.mxu0 0.0
    %441 = vmatpush2.msra.mxu0 0.0
    %442 = vmatprep.subr.mxu0 0.0
    %443 = vmatpush2.msra.mxu0 0.0
    %444 = vmatprep.mubr.f32.mxu0 0.0
    %445 = vmatmul.mubr.f32.gmra.mxu0 %v378
    %v446 = vpop.f32.mrf.mxu0
    %v447 = vadd.f32 %v374, %v446
    %v448 = vpop.f32.mrf.mxu0
    %449 = vdwg.mxu0
    %v450 = vld [vmem:[#allocation4] sm:$0x1]
    %v452 = vlaneseq
    %v453 = vshrl.u32 %v452, 7
    %v454 = vsub.s32 0, %v453
    %v455 = vrot.slane %v450, %v454
    %v457 = vadd.f32 %v447, %v455
    %v458 = vld [vmem:[%s27] sm:$0xff]
    %v459 = vld [vmem:[%s27 + $0x8] sm:$0xff]
    %v460 = vld [vmem:[%s27 + $0x10] sm:$0xff]
    %v461 = vld [vmem:[%s27 + $0x18] sm:$0xff]
    %v462 = vld [vmem:[%s29] sm:$0xff]
    %v463 = vld [vmem:[%s29 + $0x8] sm:$0xff]
    %vm464 = vcmask 130048
    %v466 = vsel %vm464, %v292, 0
    %468 = vmatprep.subr.mxu0 0.0
    %469 = vmatpush1.msra.mxu0 0.0
    %470 = vmatprep.subr.mxu0 0.0
    %471 = vmatpush1.msra.mxu0 0.0
    %472 = vmatprep.subr.mxu0 0.0
    %473 = vmatpush1.msra.mxu0 0.0
    %474 = vmatprep.subr.mxu0 0.0
    %475 = vmatpush1.msra.mxu0 0.0
    %476 = vmatprep.subr.mxu0 0.0
    %477 = vmatpush1.msra.mxu0 0.0
    %478 = vmatprep.subr.mxu0 0.0
    %479 = vmatpush1.msra.mxu0 0.0
    %480 = vmatprep.subr.mxu0 0.0
    %481 = vmatpush1.msra.mxu0 0.0
    %482 = vmatprep.subr.mxu0 0.0
    %483 = vmatpush1.msra.mxu0 0.0
    %484 = vmatprep.subr.mxu0 0.0
    %485 = vmatpush1.msra.mxu0 0.0
    %486 = vmatprep.subr.mxu0 0.0
    %487 = vmatpush1.msra.mxu0 0.0
    %488 = vmatprep.subr.mxu0 0.0
    %489 = vmatpush1.msra.mxu0 0.0
    %490 = vmatprep.subr.mxu0 0.0
    %491 = vmatpush1.msra.mxu0 0.0
    %492 = vmatprep.subr.mxu0 0.0
    %493 = vmatpush1.msra.mxu0 0.0
    %494 = vmatprep.subr.mxu0 0.0
    %495 = vmatpush1.msra.mxu0 0.0
    %496 = vmatprep.subr.mxu0 0.0
    %497 = vmatpush1.msra.mxu0 %v463
    %498 = vmatprep.subr.mxu0 0.0
    %499 = vmatpush1.msra.mxu0 %v462
    %500 = vmatprep.subr.mxu0 0.0
    %501 = vmatpush2.msra.mxu0 0.0
    %502 = vmatprep.subr.mxu0 0.0
    %503 = vmatpush2.msra.mxu0 0.0
    %504 = vmatprep.subr.mxu0 0.0
    %505 = vmatpush2.msra.mxu0 0.0
    %506 = vmatprep.subr.mxu0 0.0
    %507 = vmatpush2.msra.mxu0 0.0
    %508 = vmatprep.subr.mxu0 0.0
    %509 = vmatpush2.msra.mxu0 0.0
    %510 = vmatprep.subr.mxu0 0.0
    %511 = vmatpush2.msra.mxu0 0.0
    %512 = vmatprep.subr.mxu0 0.0
    %513 = vmatpush2.msra.mxu0 0.0
    %514 = vmatprep.subr.mxu0 0.0
    %515 = vmatpush2.msra.mxu0 0.0
    %516 = vmatprep.subr.mxu0 0.0
    %517 = vmatpush2.msra.mxu0 0.0
    %518 = vmatprep.subr.mxu0 0.0
    %519 = vmatpush2.msra.mxu0 0.0
    %520 = vmatprep.subr.mxu0 0.0
    %521 = vmatpush2.msra.mxu0 0.0
    %522 = vmatprep.subr.mxu0 0.0
    %523 = vmatpush2.msra.mxu0 0.0
    %524 = vmatprep.subr.mxu0 0.0
    %525 = vmatpush2.msra.mxu0 0.0
    %526 = vmatprep.subr.mxu0 0.0
    %527 = vmatpush2.msra.mxu0 0.0
    %528 = vmatprep.subr.mxu0 0.0
    %529 = vmatpush2.msra.mxu0 0.0
    %530 = vmatprep.subr.mxu0 0.0
    %531 = vmatpush2.msra.mxu0 0.0
    %532 = vmatprep.mubr.f32.mxu0 0.0
    %533 = vmatmul.mubr.f32.gmra.mxu0 %v466
    %v534 = vpop.f32.mrf.mxu0
    %v535 = vadd.f32 0.0, %v534
    %v536 = vpop.f32.mrf.mxu0
    %537 = vdwg.mxu0
    %v539 = vsel %vm303, %v457, 0
    %541 = vmatprep.subr.mxu0 0.0
    %542 = vmatpush1.msra.mxu0 0.0
    %543 = vmatprep.subr.mxu0 0.0
    %544 = vmatpush1.msra.mxu0 0.0
    %545 = vmatprep.subr.mxu0 0.0
    %546 = vmatpush1.msra.mxu0 0.0
    %547 = vmatprep.subr.mxu0 0.0
    %548 = vmatpush1.msra.mxu0 0.0
    %549 = vmatprep.subr.mxu0 0.0
    %550 = vmatpush1.msra.mxu0 0.0
    %551 = vmatprep.subr.mxu0 0.0
    %552 = vmatpush1.msra.mxu0 0.0
    %553 = vmatprep.subr.mxu0 0.0
    %554 = vmatpush1.msra.mxu0 0.0
    %555 = vmatprep.subr.mxu0 0.0
    %556 = vmatpush1.msra.mxu0 0.0
    %557 = vmatprep.subr.mxu0 0.0
    %558 = vmatpush1.msra.mxu0 0.0
    %559 = vmatprep.subr.mxu0 0.0
    %560 = vmatpush1.msra.mxu0 0.0
    %561 = vmatprep.subr.mxu0 0.0
    %562 = vmatpush1.msra.mxu0 0.0
    %563 = vmatprep.subr.mxu0 0.0
    %564 = vmatpush1.msra.mxu0 0.0
    %565 = vmatprep.subr.mxu0 0.0
    %566 = vmatpush1.msra.mxu0 %v461
    %567 = vmatprep.subr.mxu0 0.0
    %568 = vmatpush1.msra.mxu0 %v460
    %569 = vmatprep.subr.mxu0 0.0
    %570 = vmatpush1.msra.mxu0 %v459
    %571 = vmatprep.subr.mxu0 0.0
    %572 = vmatpush1.msra.mxu0 %v458
    %573 = vmatprep.subr.mxu0 0.0
    %574 = vmatpush2.msra.mxu0 0.0
    %575 = vmatprep.subr.mxu0 0.0
    %576 = vmatpush2.msra.mxu0 0.0
    %577 = vmatprep.subr.mxu0 0.0
    %578 = vmatpush2.msra.mxu0 0.0
    %579 = vmatprep.subr.mxu0 0.0
    %580 = vmatpush2.msra.mxu0 0.0
    %581 = vmatprep.subr.mxu0 0.0
    %582 = vmatpush2.msra.mxu0 0.0
    %583 = vmatprep.subr.mxu0 0.0
    %584 = vmatpush2.msra.mxu0 0.0
    %585 = vmatprep.subr.mxu0 0.0
    %586 = vmatpush2.msra.mxu0 0.0
    %587 = vmatprep.subr.mxu0 0.0
    %588 = vmatpush2.msra.mxu0 0.0
    %589 = vmatprep.subr.mxu0 0.0
    %590 = vmatpush2.msra.mxu0 0.0
    %591 = vmatprep.subr.mxu0 0.0
    %592 = vmatpush2.msra.mxu0 0.0
    %593 = vmatprep.subr.mxu0 0.0
    %594 = vmatpush2.msra.mxu0 0.0
    %595 = vmatprep.subr.mxu0 0.0
    %596 = vmatpush2.msra.mxu0 0.0
    %597 = vmatprep.subr.mxu0 0.0
    %598 = vmatpush2.msra.mxu0 0.0
    %599 = vmatprep.subr.mxu0 0.0
    %600 = vmatpush2.msra.mxu0 0.0
    %601 = vmatprep.subr.mxu0 0.0
    %602 = vmatpush2.msra.mxu0 0.0
    %603 = vmatprep.subr.mxu0 0.0
    %604 = vmatpush2.msra.mxu0 0.0
    %605 = vmatprep.mubr.f32.mxu0 0.0
    %606 = vmatmul.mubr.f32.gmra.mxu0 %v539
    %v607 = vpop.f32.mrf.mxu0
    %v608 = vadd.f32 %v535, %v607
    %v609 = vpop.f32.mrf.mxu0
    %610 = vdwg.mxu0
    %v611 = vld [vmem:[#allocation7] sm:$0x1]
    %v613 = vlaneseq
    %v614 = vshrl.u32 %v613, 7
    %v615 = vsub.s32 0, %v614
    %v616 = vrot.slane %v611, %v615
    %v618 = vadd.f32 %v608, %v616
    %v619 = vxor.u32 %v618, 2147483648
    %v620 = vmul.f32 %v619, 1.442695
    %v621 = vpow.pop %v620
    %v622 = vadd.f32 %v621, 1.0
    %v623 = vrcp.pop %v622
    %v624 = vmul.f32 1.0, %v623
    %v625 = vtanh.pop %v618
    %627 = vrot.lane.b32.xlu0 %v293, 16
    %v628 = vpop.permute.xlu0 %627
    %v630 = vmul.f32 %v624, %v628
    %632 = vrot.lane.b32.xlu0 %v625, 96
    %v633 = vpop.permute.xlu0 %632
    %v635 = vmul.f32 %v624, %v633
    %637 = vrot.lane.b32.xlu0 %v635, 16
    %v638 = vpop.permute.xlu0 %637
    %v640 = vadd.f32 %v630, %v638
    %v641 = vtanh.pop %v640
    %643 = vrot.lane.b32.xlu0 %v641, 32
    %v644 = vpop.permute.xlu0 %643
    %v646 = vmul.f32 %v624, %v644
    %v647 = vld [vmem:[%s33] sm:$0xff]
    %v648 = vld [vmem:[%s33 + $0x8] sm:$0xff]
    %v649 = vld [vmem:[%s33 + $0x10] sm:$0xff]
    %v650 = vld [vmem:[%s33 + $0x18] sm:$0xff]
    %652 = vrot.lane.b32.xlu0 %v640, 112
    %v653 = vpop.permute.xlu0 %652
    %v654 = vsel %vm464, %v653, 0
    %656 = vmatprep.subr.mxu0 0.0
    %657 = vmatpush1.msra.mxu0 0.0
    %658 = vmatprep.subr.mxu0 0.0
    %659 = vmatpush1.msra.mxu0 0.0
    %660 = vmatprep.subr.mxu0 0.0
    %661 = vmatpush1.msra.mxu0 0.0
    %662 = vmatprep.subr.mxu0 0.0
    %663 = vmatpush1.msra.mxu0 0.0
    %664 = vmatprep.subr.mxu0 0.0
    %665 = vmatpush1.msra.mxu0 0.0
    %666 = vmatprep.subr.mxu0 0.0
    %667 = vmatpush1.msra.mxu0 0.0
    %668 = vmatprep.subr.mxu0 0.0
    %669 = vmatpush1.msra.mxu0 0.0
    %670 = vmatprep.subr.mxu0 0.0
    %671 = vmatpush1.msra.mxu0 0.0
    %672 = vmatprep.subr.mxu0 0.0
    %673 = vmatpush1.msra.mxu0 0.0
    %674 = vmatprep.subr.mxu0 0.0
    %675 = vmatpush1.msra.mxu0 0.0
    %676 = vmatprep.subr.mxu0 0.0
    %677 = vmatpush1.msra.mxu0 0.0
    %678 = vmatprep.subr.mxu0 0.0
    %679 = vmatpush1.msra.mxu0 0.0
    %680 = vmatprep.subr.mxu0 0.0
    %681 = vmatpush1.msra.mxu0 0.0
    %682 = vmatprep.subr.mxu0 0.0
    %683 = vmatpush1.msra.mxu0 0.0
    %684 = vmatprep.subr.mxu0 0.0
    %685 = vmatpush1.msra.mxu0 %v650
    %686 = vmatprep.subr.mxu0 0.0
    %687 = vmatpush1.msra.mxu0 %v649
    %688 = vmatprep.subr.mxu0 0.0
    %689 = vmatpush2.msra.mxu0 0.0
    %690 = vmatprep.subr.mxu0 0.0
    %691 = vmatpush2.msra.mxu0 0.0
    %692 = vmatprep.subr.mxu0 0.0
    %693 = vmatpush2.msra.mxu0 0.0
    %694 = vmatprep.subr.mxu0 0.0
    %695 = vmatpush2.msra.mxu0 0.0
    %696 = vmatprep.subr.mxu0 0.0
    %697 = vmatpush2.msra.mxu0 0.0
    %698 = vmatprep.subr.mxu0 0.0
    %699 = vmatpush2.msra.mxu0 0.0
    %700 = vmatprep.subr.mxu0 0.0
    %701 = vmatpush2.msra.mxu0 0.0
    %702 = vmatprep.subr.mxu0 0.0
    %703 = vmatpush2.msra.mxu0 0.0
    %704 = vmatprep.subr.mxu0 0.0
    %705 = vmatpush2.msra.mxu0 0.0
    %706 = vmatprep.subr.mxu0 0.0
    %707 = vmatpush2.msra.mxu0 0.0
    %708 = vmatprep.subr.mxu0 0.0
    %709 = vmatpush2.msra.mxu0 0.0
    %710 = vmatprep.subr.mxu0 0.0
    %711 = vmatpush2.msra.mxu0 0.0
    %712 = vmatprep.subr.mxu0 0.0
    %713 = vmatpush2.msra.mxu0 0.0
    %714 = vmatprep.subr.mxu0 0.0
    %715 = vmatpush2.msra.mxu0 0.0
    %716 = vmatprep.subr.mxu0 0.0
    %717 = vmatpush2.msra.mxu0 0.0
    %718 = vmatprep.subr.mxu0 0.0
    %719 = vmatpush2.msra.mxu0 0.0
    %720 = vmatprep.mubr.f32.mxu0 0.0
    %721 = vmatmul.mubr.f32.gmra.mxu0 %v654
    %v722 = vpop.f32.mrf.mxu0
    %v723 = vadd.f32 0.0, %v722
    %v724 = vpop.f32.mrf.mxu0
    %725 = vdwg.mxu0
    %727 = vrot.lane.b32.xlu0 %v646, 80
    %v728 = vpop.permute.xlu0 %727
    %v729 = vsel %vm464, %v728, 0
    %731 = vmatprep.subr.mxu0 0.0
    %732 = vmatpush1.msra.mxu0 0.0
    %733 = vmatprep.subr.mxu0 0.0
    %734 = vmatpush1.msra.mxu0 0.0
    %735 = vmatprep.subr.mxu0 0.0
    %736 = vmatpush1.msra.mxu0 0.0
    %737 = vmatprep.subr.mxu0 0.0
    %738 = vmatpush1.msra.mxu0 0.0
    %739 = vmatprep.subr.mxu0 0.0
    %740 = vmatpush1.msra.mxu0 0.0
    %741 = vmatprep.subr.mxu0 0.0
    %742 = vmatpush1.msra.mxu0 0.0
    %743 = vmatprep.subr.mxu0 0.0
    %744 = vmatpush1.msra.mxu0 0.0
    %745 = vmatprep.subr.mxu0 0.0
    %746 = vmatpush1.msra.mxu0 0.0
    %747 = vmatprep.subr.mxu0 0.0
    %748 = vmatpush1.msra.mxu0 0.0
    %749 = vmatprep.subr.mxu0 0.0
    %750 = vmatpush1.msra.mxu0 0.0
    %751 = vmatprep.subr.mxu0 0.0
    %752 = vmatpush1.msra.mxu0 0.0
    %753 = vmatprep.subr.mxu0 0.0
    %754 = vmatpush1.msra.mxu0 0.0
    %755 = vmatprep.subr.mxu0 0.0
    %756 = vmatpush1.msra.mxu0 0.0
    %757 = vmatprep.subr.mxu0 0.0
    %758 = vmatpush1.msra.mxu0 0.0
    %759 = vmatprep.subr.mxu0 0.0
    %760 = vmatpush1.msra.mxu0 %v648
    %761 = vmatprep.subr.mxu0 0.0
    %762 = vmatpush1.msra.mxu0 %v647
    %763 = vmatprep.subr.mxu0 0.0
    %764 = vmatpush2.msra.mxu0 0.0
    %765 = vmatprep.subr.mxu0 0.0
    %766 = vmatpush2.msra.mxu0 0.0
    %767 = vmatprep.subr.mxu0 0.0
    %768 = vmatpush2.msra.mxu0 0.0
    %769 = vmatprep.subr.mxu0 0.0
    %770 = vmatpush2.msra.mxu0 0.0
    %771 = vmatprep.subr.mxu0 0.0
    %772 = vmatpush2.msra.mxu0 0.0
    %773 = vmatprep.subr.mxu0 0.0
    %774 = vmatpush2.msra.mxu0 0.0
    %775 = vmatprep.subr.mxu0 0.0
    %776 = vmatpush2.msra.mxu0 0.0
    %777 = vmatprep.subr.mxu0 0.0
    %778 = vmatpush2.msra.mxu0 0.0
    %779 = vmatprep.subr.mxu0 0.0
    %780 = vmatpush2.msra.mxu0 0.0
    %781 = vmatprep.subr.mxu0 0.0
    %782 = vmatpush2.msra.mxu0 0.0
    %783 = vmatprep.subr.mxu0 0.0
    %784 = vmatpush2.msra.mxu0 0.0
    %785 = vmatprep.subr.mxu0 0.0
    %786 = vmatpush2.msra.mxu0 0.0
    %787 = vmatprep.subr.mxu0 0.0
    %788 = vmatpush2.msra.mxu0 0.0
    %789 = vmatprep.subr.mxu0 0.0
    %790 = vmatpush2.msra.mxu0 0.0
    %791 = vmatprep.subr.mxu0 0.0
    %792 = vmatpush2.msra.mxu0 0.0
    %793 = vmatprep.subr.mxu0 0.0
    %794 = vmatpush2.msra.mxu0 0.0
    %795 = vmatprep.mubr.f32.mxu0 0.0
    %796 = vmatmul.mubr.f32.gmra.mxu0 %v729
    %v797 = vpop.f32.mrf.mxu0
    %v798 = vadd.f32 %v723, %v797
    %v799 = vpop.f32.mrf.mxu0
    %800 = vdwg.mxu0
    %v801 = vld [vmem:[#allocation9] sm:$0x1]
    %v803 = vlaneseq
    %v804 = vshrl.u32 %v803, 7
    %v805 = vsub.s32 0, %v804
    %v806 = vrot.slane %v801, %v805
    %v808 = vadd.f32 %v798, %v806
    %v809 = vld [vmem:[%s9] sm:$0xff]
    %v810 = vld [vmem:[%s9 + $0x8] sm:$0xff]
    %v813 = vunpack.c.l.s4 1966171168
    %v814 = vunpack.c.0.s8 %v813
    %v815 = vlaneseq
    %v816 = vshrl.u32 %v815, 7
    %v817 = vsub.s32 %v814, %v816
    %v818 = vrot.slane %v808, %v817
    %v819 = vcombine.high %v818, %v818
    %v821 = vunpack.c.l.s4 1966171168
    %v822 = vunpack.c.0.s8 %v821
    %v823 = vlaneseq
    %v824 = vshrl.u32 %v823, 7
    %v825 = vsub.s32 %v822, %v824
    %v826 = vrot.slane %v818, %v825
    %v828 = vunpack.c.l.s4 1966171168
    %v829 = vunpack.c.0.s8 %v828
    %v830 = vlaneseq
    %v831 = vshrl.u32 %v830, 7
    %v832 = vsub.s32 %v829, %v831
    %v833 = vrot.slane %v819, %v832
    %v834 = vlaneseq
    %v835 = vshrl.u32 %v834, 7
    %v836 = vsub.s32 0, %v835
    %v837 = vrot.slane %v826, %v836
    %v838 = vlaneseq
    %v839 = vshrl.u32 %v838, 7
    %v840 = vsub.s32 0, %v839
    %v841 = vrot.slane %v833, %v840
    %v844 = vadd.f32 %v809, %v837
    %v845 = vadd.f32 %v810, %v841
    %v846 = vtanh.pop %v844
    %v847 = vtanh.pop %v845
    %v848 = vld [vmem:[#allocation10] sm:$0x1]
    %v850 = vlaneseq
    %v851 = vshrl.u32 %v850, 7
    %v852 = vsub.s32 0, %v851
    %v853 = vrot.slane %v848, %v852
    %v855 = vmul.f32 %v846, %v853
    %v856 = vmul.f32 %v847, %v853
    %v857 = vsel %vm303, %v855, 0.0
    %858 = vadd.xlane.f32.xlu0 %v857
    %v859 = vpop.xlane.xlu0 %858
    %v860 = vsel %vm303, %v856, 0.0
    %861 = vadd.xlane.f32.xlu0 %v860
    %v862 = vpop.xlane.xlu0 %861
    %v863 = vld [vmem:[%s15] sm:$0x3]
    %v864 = vmul.f32 %v859, 1.442695
    %v865 = vpow.pop %v864
    %v866 = vmul.f32 %v862, 1.442695
    %v867 = vpow.pop %v866
    %v870 = vlaneseq
    %v871 = vand.u32 %v870, 127
    %v872 = vlaneseq
    %v873 = vshrl.u32 %v872, 7
    %v874 = vsub.s32 %v871, %v873
    %v875 = vrot.slane %v865, %v874
    %v876 = vlaneseq
    %v877 = vshrl.u32 %v876, 7
    %v878 = vsub.s32 %v871, %v877
    %v879 = vrot.slane %v867, %v878
    %vm880 = vcmask 1041409
    %v881 = vsel %vm880, %v879, %v875
    %v883 = vadd.f32 %v863, %v881
    %v884 = vld [vmem:[%s11] sm:$0x3]
    %v886 = vlaneseq
    %v887 = vshrl.u32 %v886, 7
    %v888 = vsub.s32 0, %v887
    %v889 = vrot.slane %v884, %v888
    %891 = vbcast.lane.b32.xlu0 %v889, 256
    %v892 = vpop.permute.xlu0 %891
    %v893 = vlaneseq
    %v894 = vshrl.u32 %v893, 7
    %v895 = vsub.s32 1, %v894
    %v896 = vrot.slane %v884, %v895
    %898 = vbcast.lane.b32.xlu0 %v896, 256
    %v899 = vpop.permute.xlu0 %898
    %v902 = vmul.f32 %v865, %v892
    %v903 = vmul.f32 %v867, %v899
    %906 = vset.pattern.permute.xlu0 0
    %907 = vperm.xlu0 %906, %v902
    %v908 = vpop.permute.xlu0 %907
    %909 = vset.pattern.permute.xlu0 0
    %910 = vperm.xlu0 %909, %v903
    %v911 = vpop.permute.xlu0 %910
    %v912 = vlaneseq
    %v913 = vshrl.u32 %v912, 7
    %v914 = vsub.s32 %v871, %v913
    %v915 = vrot.slane %v908, %v914
    %v916 = vlaneseq
    %v917 = vshrl.u32 %v916, 7
    %v918 = vsub.s32 %v871, %v917
    %v919 = vrot.slane %v911, %v918
    %v920 = vsel %vm880, %v919, %v915
    %vm922 = vcmask 58368
    %v923 = vsel %vm922, %v920, 0.0
    %924 = vadd.xlane.f32.xlu0 %v923
    %v925 = vpop.xlane.xlu0 %924
    %v927 = vlaneseq
    %v928 = vshrl.u32 %v927, 7
    %v929 = vsub.s32 0, %v928
    %v930 = vrot.slane %v925, %v929
    %v931 = vlaneseq
    %v932 = vshrl.u32 %v931, 7
    %v933 = vsub.s32 1, %v932
    %v934 = vrot.slane %v925, %v933
    %v937 = vrcp.pop %v930
    %v938 = vmul.f32 %v902, %v937
    %v939 = vrcp.pop %v934
    %v940 = vmul.f32 %v903, %v939
    %v941 = vld [vmem:[%s7] sm:$0xff]
    %v942 = vld [vmem:[%s7 + $0x8] sm:$0xff]
    %944 = vset.pattern.permute.xlu0 0
    %945 = vperm.xlu0 %944, %v938
    %v946 = vpop.permute.xlu0 %945
    %949 = vset.pattern.permute.xlu0 0
    %950 = vperm.xlu0 %949, %v940
    %v951 = vpop.permute.xlu0 %950
    %v953 = vmul.f32 %v946, %v941
    %v954 = vmul.f32 %v951, %v942
    %v955 = vsel %vm303, %v953, 0.0
    %v956 = vrot.slane %v955, 4
    %v957 = vadd.f32 %v955, %v956
    %v958 = vrot.slane %v957, 2
    %v959 = vadd.f32 %v957, %v958
    %v960 = vrot.slane %v959, 1
    %v961 = vadd.f32 %v959, %v960
    %v962 = vsel %vm303, %v954, 0.0
    %v963 = vrot.slane %v962, 4
    %v964 = vadd.f32 %v962, %v963
    %v965 = vrot.slane %v964, 2
    %v966 = vadd.f32 %v964, %v965
    %v967 = vrot.slane %v966, 1
    %v968 = vadd.f32 %v966, %v967
    %s969 = sld [smem:[#allocation2]]
    %v970 = vld [vmem:[%s17] sm:$0xf]
    %v971 = vld [vmem:[%s17 + $0x4] sm:$0xf]
    %v972 = vld [vmem:[%s19] sm:$0xf]
    %v973 = vld [vmem:[%s19 + $0x4] sm:$0xf]
    %v974 = vld [vmem:[%s41] sm:$0xff]
    %v975 = vld [vmem:[%s41 + $0x8] sm:$0xff]
    %v976 = vld [vmem:[#allocation12] sm:$0x1]
    %v978 = vlaneseq
    %v979 = vshrl.u32 %v978, 7
    %v980 = vsub.s32 0, %v979
    %v981 = vrot.slane %v976, %v980
    %983 = vmatprep.subr.mxu0 0.0
    %984 = vmatpush1.msra.mxu0 0.0
    %985 = vmatprep.subr.mxu0 0.0
    %986 = vmatpush1.msra.mxu0 0.0
    %987 = vmatprep.subr.mxu0 0.0
    %988 = vmatpush1.msra.mxu0 0.0
    %989 = vmatprep.subr.mxu0 0.0
    %990 = vmatpush1.msra.mxu0 0.0
    %991 = vmatprep.subr.mxu0 0.0
    %992 = vmatpush1.msra.mxu0 0.0
    %993 = vmatprep.subr.mxu0 0.0
    %994 = vmatpush1.msra.mxu0 0.0
    %995 = vmatprep.subr.mxu0 0.0
    %996 = vmatpush1.msra.mxu0 0.0
    %997 = vmatprep.subr.mxu0 0.0
    %998 = vmatpush1.msra.mxu0 0.0
    %999 = vmatprep.subr.mxu0 0.0
    %1000 = vmatpush1.msra.mxu0 0.0
    %1001 = vmatprep.subr.mxu0 0.0
    %1002 = vmatpush1.msra.mxu0 0.0
    %1003 = vmatprep.subr.mxu0 0.0
    %1004 = vmatpush1.msra.mxu0 0.0
    %1005 = vmatprep.subr.mxu0 0.0
    %1006 = vmatpush1.msra.mxu0 0.0
    %1007 = vmatprep.subr.mxu0 0.0
    %1008 = vmatpush1.msra.mxu0 0.0
    %1009 = vmatprep.subr.mxu0 0.0
    %1010 = vmatpush1.msra.mxu0 0.0
    %1011 = vmatprep.subr.mxu0 0.0
    %1012 = vmatpush1.msra.mxu0 %v975
    %1013 = vmatprep.subr.mxu0 0.0
    %1014 = vmatpush1.msra.mxu0 %v974
    %1015 = vmatprep.subr.mxu0 0.0
    %1016 = vmatpush2.msra.mxu0 0.0
    %1017 = vmatprep.subr.mxu0 0.0
    %1018 = vmatpush2.msra.mxu0 0.0
    %1019 = vmatprep.subr.mxu0 0.0
    %1020 = vmatpush2.msra.mxu0 0.0
    %1021 = vmatprep.subr.mxu0 0.0
    %1022 = vmatpush2.msra.mxu0 0.0
    %1023 = vmatprep.subr.mxu0 0.0
    %1024 = vmatpush2.msra.mxu0 0.0
    %1025 = vmatprep.subr.mxu0 0.0
    %1026 = vmatpush2.msra.mxu0 0.0
    %1027 = vmatprep.subr.mxu0 0.0
    %1028 = vmatpush2.msra.mxu0 0.0
    %1029 = vmatprep.subr.mxu0 0.0
    %1030 = vmatpush2.msra.mxu0 0.0
    %1031 = vmatprep.subr.mxu0 0.0
    %1032 = vmatpush2.msra.mxu0 0.0
    %1033 = vmatprep.subr.mxu0 0.0
    %1034 = vmatpush2.msra.mxu0 0.0
    %1035 = vmatprep.subr.mxu0 0.0
    %1036 = vmatpush2.msra.mxu0 0.0
    %1037 = vmatprep.subr.mxu0 0.0
    %1038 = vmatpush2.msra.mxu0 0.0
    %1039 = vmatprep.subr.mxu0 0.0
    %1040 = vmatpush2.msra.mxu0 0.0
    %1041 = vmatprep.subr.mxu0 0.0
    %1042 = vmatpush2.msra.mxu0 0.0
    %1043 = vmatprep.subr.mxu0 0.0
    %1044 = vmatpush2.msra.mxu0 0.0
    %1045 = vmatprep.subr.mxu0 0.0
    %1046 = vmatpush2.msra.mxu0 0.0
    %1047 = vmatprep.mubr.f32.mxu0 0.0
    %1048 = vmatmul.mubr.f32.gmra.mxu0 %v729
    %v1049 = vpop.f32.mrf.mxu0
    %v1050 = vadd.f32 %v981, %v1049
    %v1051 = vpop.f32.mrf.mxu0
    %1052 = vdwg.mxu0
    %v1055 = vunpack.c.l.s4 1966171168
    %v1056 = vunpack.c.0.s8 %v1055
    %v1057 = vlaneseq
    %v1058 = vshrl.u32 %v1057, 7
    %v1059 = vsub.s32 %v1056, %v1058
    %v1060 = vrot.slane %v1050, %v1059
    %v1061 = vcombine.high %v1060, %v1060
    %v1063 = vunpack.c.l.s4 1966171168
    %v1064 = vunpack.c.0.s8 %v1063
    %v1065 = vlaneseq
    %v1066 = vshrl.u32 %v1065, 7
    %v1067 = vsub.s32 %v1064, %v1066
    %v1068 = vrot.slane %v1060, %v1067
    %v1070 = vunpack.c.l.s4 1966171168
    %v1071 = vunpack.c.0.s8 %v1070
    %v1072 = vlaneseq
    %v1073 = vshrl.u32 %v1072, 7
    %v1074 = vsub.s32 %v1071, %v1073
    %v1075 = vrot.slane %v1061, %v1074
    %v1076 = vlaneseq
    %v1077 = vshrl.u32 %v1076, 7
    %v1078 = vsub.s32 0, %v1077
    %v1079 = vrot.slane %v1068, %v1078
    %v1080 = vlaneseq
    %v1081 = vshrl.u32 %v1080, 7
    %v1082 = vsub.s32 0, %v1081
    %v1083 = vrot.slane %v1075, %v1082
    %v1086 = vadd.f32 %v972, %v1079
    %v1087 = vadd.f32 %v973, %v1083
    %v1088 = vtanh.pop %v1086
    %v1089 = vtanh.pop %v1087
    %v1090 = vld [vmem:[#allocation13] sm:$0x1]
    %v1092 = vlaneseq
    %v1093 = vshrl.u32 %v1092, 7
    %v1094 = vsub.s32 0, %v1093
    %v1095 = vrot.slane %v1090, %v1094
    %v1097 = vmul.f32 %v1088, %v1095
    %v1098 = vmul.f32 %v1089, %v1095
    %vm1099 = vcmask 125952
    %v1100 = vsel %vm1099, %v1097, 0.0
    %1101 = vadd.xlane.f32.xlu0 %v1100
    %v1102 = vpop.xlane.xlu0 %1101
    %v1103 = vsel %vm1099, %v1098, 0.0
    %1104 = vadd.xlane.f32.xlu0 %v1103
    %v1105 = vpop.xlane.xlu0 %1104
    %v1106 = vstv %s969
    %vm1107 = vcmp.lt.s32.totalorder %v871, %v1106
    %v1110 = vlaneseq
    %v1111 = vshrl.u32 %v1110, 7
    %v1112 = vsub.s32 %v871, %v1111
    %v1113 = vrot.slane %v1102, %v1112
    %v1114 = vlaneseq
    %v1115 = vshrl.u32 %v1114, 7
    %v1116 = vsub.s32 %v871, %v1115
    %v1117 = vrot.slane %v1105, %v1116
    %v1118 = vsel %vm880, %v1117, %v1113
    %v1120 = vsel %vm1107, %v1118, -1e+30
    %vm1121 = vcmask 25600
    %v1122 = vsel %vm1121, %v1120, -inf
    %1123 = vmax.xlane.f32.xlu0 %v1122
    %v1124 = vpop.xlane.xlu0 %1123
    %v1125 = vsub.f32 %v1120, %v1124
    %v1126 = vmul.f32 %v1125, 1.442695
    %v1127 = vpow.pop %v1126
    %v1128 = vsel %vm1121, %v1127, 0.0
    %1129 = vadd.xlane.f32.xlu0 %v1128
    %v1130 = vpop.xlane.xlu0 %1129
    %v1131 = vrcp.pop %v1130
    %v1132 = vmul.f32 %v1127, %v1131
    %v1133 = vlaneseq
    %v1134 = vshrl.u32 %v1133, 7
    %v1135 = vsub.s32 0, %v1134
    %v1136 = vrot.slane %v1132, %v1135
    %1138 = vbcast.lane.b32.xlu0 %v1136, 256
    %v1139 = vpop.permute.xlu0 %1138
    %v1140 = vlaneseq
    %v1141 = vshrl.u32 %v1140, 7
    %v1142 = vsub.s32 1, %v1141
    %v1143 = vrot.slane %v1132, %v1142
    %1145 = vbcast.lane.b32.xlu0 %v1143, 256
    %v1146 = vpop.permute.xlu0 %1145
    %v1147 = vmul.f32 %v1139, %v970
    %v1148 = vmul.f32 %v1146, %v971
    %v1149 = vsel %vm1099, %v1147, 0.0
    %v1150 = vrot.slane %v1149, 4
    %v1151 = vadd.f32 %v1149, %v1150
    %v1152 = vrot.slane %v1151, 2
    %v1153 = vadd.f32 %v1151, %v1152
    %v1154 = vrot.slane %v1153, 1
    %v1155 = vadd.f32 %v1153, %v1154
    %v1156 = vsel %vm1099, %v1148, 0.0
    %v1157 = vrot.slane %v1156, 4
    %v1158 = vadd.f32 %v1156, %v1157
    %v1159 = vrot.slane %v1158, 2
    %v1160 = vadd.f32 %v1158, %v1159
    %v1161 = vrot.slane %v1160, 1
    %v1162 = vadd.f32 %v1160, %v1161
    %v1163 = vld [vmem:[#allocation15] sm:$0x1]
    %v1165 = vlaneseq
    %v1166 = vshrl.u32 %v1165, 7
    %v1167 = vsub.s32 0, %v1166
    %v1168 = vrot.slane %v1163, %v1167
    %v1170 = vmul.f32 %v961, %v1168
    %v1171 = vmul.f32 %v968, %v1168
    %v1174 = vrot.slane %v1171, 7
    %v1175 = vsel %vm880, %v1174, %v1170
    %vm1177 = vcmask 254976
    %v1178 = vsel %vm1177, %v1175, 0.0
    %1179 = vadd.xlane.f32.xlu0 %v1178
    %v1180 = vpop.xlane.xlu0 %1179
    %v1181 = vld [vmem:[#allocation16] sm:$0x1]
    %v1183 = vlaneseq
    %v1184 = vshrl.u32 %v1183, 7
    %v1185 = vsub.s32 0, %v1184
    %v1186 = vrot.slane %v1181, %v1185
    %v1188 = vmul.f32 %v1155, %v1186
    %v1189 = vmul.f32 %v1162, %v1186
    %v1192 = vrot.slane %v1189, 7
    %v1193 = vsel %vm880, %v1192, %v1188
    %vm1195 = vcmask 123904
    %v1196 = vsel %vm1195, %v1193, 0.0
    %1197 = vadd.xlane.f32.xlu0 %v1196
    %v1198 = vpop.xlane.xlu0 %1197
    %v1199 = vadd.f32 %v1180, %v1198
    %v1200 = vld [vmem:[#allocation18] sm:$0x1]
    %v1202 = vlaneseq
    %v1203 = vshrl.u32 %v1202, 7
    %v1204 = vsub.s32 0, %v1203
    %v1205 = vrot.slane %v1200, %v1204
    %1206 = vrot.lane.b32.xlu0 %v1205, 48
    %v1207 = vpop.permute.xlu0 %1206
    %v1209 = vmul.f32 %v646, %v1207
    %1211 = vrot.lane.b32.xlu0 %v1209, 80
    %v1212 = vpop.permute.xlu0 %1211
    %v1214 = vsel %vm1195, %v1212, 0.0
    %1215 = vadd.xlane.f32.xlu0 %v1214
    %v1216 = vpop.xlane.xlu0 %1215
    %v1217 = vadd.f32 %v1199, %v1216
    %v1218 = vld [vmem:[#allocation19] sm:$0x1]
    %v1220 = vlaneseq
    %v1221 = vshrl.u32 %v1220, 7
    %v1222 = vsub.s32 0, %v1221
    %v1223 = vrot.slane %v1218, %v1222
    %1224 = vrot.lane.b32.xlu0 %v1223, 16
    %v1225 = vpop.permute.xlu0 %1224
    %v1227 = vmul.f32 %v640, %v1225
    %1229 = vrot.lane.b32.xlu0 %v1227, 112
    %v1230 = vpop.permute.xlu0 %1229
    %v1232 = vsel %vm1195, %v1230, 0.0
    %1233 = vadd.xlane.f32.xlu0 %v1232
    %v1234 = vpop.xlane.xlu0 %1233
    %v1235 = vadd.f32 %v1217, %v1234
    %v1236 = vld [vmem:[#allocation21] sm:$0x1]
    %v1238 = vlaneseq
    %v1239 = vshrl.u32 %v1238, 7
    %v1240 = vsub.s32 0, %v1239
    %v1241 = vrot.slane %v1236, %v1240
    %v1243 = vmul.f32 %v457, %v1241
    %v1244 = vsel %vm1177, %v1243, 0.0
    %1245 = vadd.xlane.f32.xlu0 %v1244
    %v1246 = vpop.xlane.xlu0 %1245
    %v1247 = vadd.f32 %v1235, %v1246
    %v1248 = vld [vmem:[#allocation3] sm:$0x1]
    %v1250 = vlaneseq
    %v1251 = vshrl.u32 %v1250, 7
    %v1252 = vsub.s32 0, %v1251
    %v1253 = vrot.slane %v1248, %v1252
    %v1255 = vadd.f32 %v1247, %v1253
    %v1256 = vxor.u32 %v1255, 2147483648
    %v1257 = vmul.f32 %v1256, 1.442695
    %v1258 = vpow.pop %v1257
    %v1259 = vadd.f32 %v1258, 1.0
    %v1260 = vrcp.pop %v1259
    %v1261 = vmul.f32 1.0, %v1260
    %v1262 = vld [vmem:[%s59] sm:$0xff]
    %v1263 = vld [vmem:[%s59 + $0x8] sm:$0xff]
    %v1264 = vld [vmem:[%s59 + $0x10] sm:$0xff]
    %v1265 = vld [vmem:[%s59 + $0x18] sm:$0xff]
    %v1266 = vld [vmem:[%s59 + $0x20] sm:$0xff]
    %v1267 = vld [vmem:[%s59 + $0x28] sm:$0xff]
    %v1268 = vld [vmem:[%s59 + $0x30] sm:$0xff]
    %v1269 = vld [vmem:[%s59 + $0x38] sm:$0xff]
    %v1272 = vsel %vm880, %v968, %v961
    %v1273 = vsel %vm303, %v1272, 0
    %1275 = vmatprep.subr.mxu0 0.0
    %1276 = vmatpush1.msra.mxu0 0.0
    %1277 = vmatprep.subr.mxu0 0.0
    %1278 = vmatpush1.msra.mxu0 0.0
    %1279 = vmatprep.subr.mxu0 0.0
    %1280 = vmatpush1.msra.mxu0 0.0
    %1281 = vmatprep.subr.mxu0 0.0
    %1282 = vmatpush1.msra.mxu0 0.0
    %1283 = vmatprep.subr.mxu0 0.0
    %1284 = vmatpush1.msra.mxu0 0.0
    %1285 = vmatprep.subr.mxu0 0.0
    %1286 = vmatpush1.msra.mxu0 0.0
    %1287 = vmatprep.subr.mxu0 0.0
    %1288 = vmatpush1.msra.mxu0 0.0
    %1289 = vmatprep.subr.mxu0 0.0
    %1290 = vmatpush1.msra.mxu0 0.0
    %1291 = vmatprep.subr.mxu0 0.0
    %1292 = vmatpush1.msra.mxu0 0.0
    %1293 = vmatprep.subr.mxu0 0.0
    %1294 = vmatpush1.msra.mxu0 0.0
    %1295 = vmatprep.subr.mxu0 0.0
    %1296 = vmatpush1.msra.mxu0 0.0
    %1297 = vmatprep.subr.mxu0 0.0
    %1298 = vmatpush1.msra.mxu0 0.0
    %1299 = vmatprep.subr.mxu0 0.0
    %1300 = vmatpush1.msra.mxu0 %v1267
    %1301 = vmatprep.subr.mxu0 0.0
    %1302 = vmatpush1.msra.mxu0 %v1266
    %1303 = vmatprep.subr.mxu0 0.0
    %1304 = vmatpush1.msra.mxu0 %v1265
    %1305 = vmatprep.subr.mxu0 0.0
    %1306 = vmatpush1.msra.mxu0 %v1264
    %1307 = vmatprep.subr.mxu0 0.0
    %1308 = vmatpush2.msra.mxu0 0.0
    %1309 = vmatprep.subr.mxu0 0.0
    %1310 = vmatpush2.msra.mxu0 0.0
    %1311 = vmatprep.subr.mxu0 0.0
    %1312 = vmatpush2.msra.mxu0 0.0
    %1313 = vmatprep.subr.mxu0 0.0
    %1314 = vmatpush2.msra.mxu0 0.0
    %1315 = vmatprep.subr.mxu0 0.0
    %1316 = vmatpush2.msra.mxu0 0.0
    %1317 = vmatprep.subr.mxu0 0.0
    %1318 = vmatpush2.msra.mxu0 0.0
    %1319 = vmatprep.subr.mxu0 0.0
    %1320 = vmatpush2.msra.mxu0 0.0
    %1321 = vmatprep.subr.mxu0 0.0
    %1322 = vmatpush2.msra.mxu0 0.0
    %1323 = vmatprep.subr.mxu0 0.0
    %1324 = vmatpush2.msra.mxu0 0.0
    %1325 = vmatprep.subr.mxu0 0.0
    %1326 = vmatpush2.msra.mxu0 0.0
    %1327 = vmatprep.subr.mxu0 0.0
    %1328 = vmatpush2.msra.mxu0 0.0
    %1329 = vmatprep.subr.mxu0 0.0
    %1330 = vmatpush2.msra.mxu0 0.0
    %1331 = vmatprep.subr.mxu0 0.0
    %1332 = vmatpush2.msra.mxu0 0.0
    %1333 = vmatprep.subr.mxu0 0.0
    %1334 = vmatpush2.msra.mxu0 0.0
    %1335 = vmatprep.subr.mxu0 0.0
    %1336 = vmatpush2.msra.mxu0 0.0
    %1337 = vmatprep.subr.mxu0 0.0
    %1338 = vmatpush2.msra.mxu0 0.0
    %1339 = vmatprep.mubr.f32.mxu0 0.0
    %1340 = vmatmul.mubr.f32.gmra.mxu0 %v1273
    %v1341 = vpop.f32.mrf.mxu0
    %v1342 = vadd.f32 0.0, %v1341
    %v1343 = vpop.f32.mrf.mxu0
    %1344 = vdwg.mxu0
    %1345 = vmatprep.subr.mxu0 0.0
    %1346 = vmatpush1.msra.mxu0 0.0
    %1347 = vmatprep.subr.mxu0 0.0
    %1348 = vmatpush1.msra.mxu0 0.0
    %1349 = vmatprep.subr.mxu0 0.0
    %1350 = vmatpush1.msra.mxu0 0.0
    %1351 = vmatprep.subr.mxu0 0.0
    %1352 = vmatpush1.msra.mxu0 0.0
    %1353 = vmatprep.subr.mxu0 0.0
    %1354 = vmatpush1.msra.mxu0 0.0
    %1355 = vmatprep.subr.mxu0 0.0
    %1356 = vmatpush1.msra.mxu0 0.0
    %1357 = vmatprep.subr.mxu0 0.0
    %1358 = vmatpush1.msra.mxu0 0.0
    %1359 = vmatprep.subr.mxu0 0.0
    %1360 = vmatpush1.msra.mxu0 0.0
    %1361 = vmatprep.subr.mxu0 0.0
    %1362 = vmatpush1.msra.mxu0 0.0
    %1363 = vmatprep.subr.mxu0 0.0
    %1364 = vmatpush1.msra.mxu0 0.0
    %1365 = vmatprep.subr.mxu0 0.0
    %1366 = vmatpush1.msra.mxu0 0.0
    %1367 = vmatprep.subr.mxu0 0.0
    %1368 = vmatpush1.msra.mxu0 0.0
    %1369 = vmatprep.subr.mxu0 0.0
    %1370 = vmatpush1.msra.mxu0 0.0
    %1371 = vmatprep.subr.mxu0 0.0
    %1372 = vmatpush1.msra.mxu0 0.0
    %1373 = vmatprep.subr.mxu0 0.0
    %1374 = vmatpush1.msra.mxu0 %v1263
    %1375 = vmatprep.subr.mxu0 0.0
    %1376 = vmatpush1.msra.mxu0 %v1262
    %1377 = vmatprep.subr.mxu0 0.0
    %1378 = vmatpush2.msra.mxu0 0.0
    %1379 = vmatprep.subr.mxu0 0.0
    %1380 = vmatpush2.msra.mxu0 0.0
    %1381 = vmatprep.subr.mxu0 0.0
    %1382 = vmatpush2.msra.mxu0 0.0
    %1383 = vmatprep.subr.mxu0 0.0
    %1384 = vmatpush2.msra.mxu0 0.0
    %1385 = vmatprep.subr.mxu0 0.0
    %1386 = vmatpush2.msra.mxu0 0.0
    %1387 = vmatprep.subr.mxu0 0.0
    %1388 = vmatpush2.msra.mxu0 0.0
    %1389 = vmatprep.subr.mxu0 0.0
    %1390 = vmatpush2.msra.mxu0 0.0
    %1391 = vmatprep.subr.mxu0 0.0
    %1392 = vmatpush2.msra.mxu0 0.0
    %1393 = vmatprep.subr.mxu0 0.0
    %1394 = vmatpush2.msra.mxu0 0.0
    %1395 = vmatprep.subr.mxu0 0.0
    %1396 = vmatpush2.msra.mxu0 0.0
    %1397 = vmatprep.subr.mxu0 0.0
    %1398 = vmatpush2.msra.mxu0 0.0
    %1399 = vmatprep.subr.mxu0 0.0
    %1400 = vmatpush2.msra.mxu0 0.0
    %1401 = vmatprep.subr.mxu0 0.0
    %1402 = vmatpush2.msra.mxu0 0.0
    %1403 = vmatprep.subr.mxu0 0.0
    %1404 = vmatpush2.msra.mxu0 0.0
    %1405 = vmatprep.subr.mxu0 0.0
    %1406 = vmatpush2.msra.mxu0 0.0
    %1407 = vmatprep.subr.mxu0 0.0
    %1408 = vmatpush2.msra.mxu0 0.0
    %1409 = vmatprep.mubr.f32.mxu0 0.0
    %1410 = vmatmul.mubr.f32.gmra.mxu0 %v729
    %v1411 = vpop.f32.mrf.mxu0
    %v1412 = vadd.f32 %v1342, %v1411
    %v1413 = vpop.f32.mrf.mxu0
    %1414 = vdwg.mxu0
    %v1417 = vsel %vm880, %v1162, %v1155
    %v1418 = vsel %vm464, %v1417, 0
    %1420 = vmatprep.subr.mxu0 0.0
    %1421 = vmatpush1.msra.mxu0 0.0
    %1422 = vmatprep.subr.mxu0 0.0
    %1423 = vmatpush1.msra.mxu0 0.0
    %1424 = vmatprep.subr.mxu0 0.0
    %1425 = vmatpush1.msra.mxu0 0.0
    %1426 = vmatprep.subr.mxu0 0.0
    %1427 = vmatpush1.msra.mxu0 0.0
    %1428 = vmatprep.subr.mxu0 0.0
    %1429 = vmatpush1.msra.mxu0 0.0
    %1430 = vmatprep.subr.mxu0 0.0
    %1431 = vmatpush1.msra.mxu0 0.0
    %1432 = vmatprep.subr.mxu0 0.0
    %1433 = vmatpush1.msra.mxu0 0.0
    %1434 = vmatprep.subr.mxu0 0.0
    %1435 = vmatpush1.msra.mxu0 0.0
    %1436 = vmatprep.subr.mxu0 0.0
    %1437 = vmatpush1.msra.mxu0 0.0
    %1438 = vmatprep.subr.mxu0 0.0
    %1439 = vmatpush1.msra.mxu0 0.0
    %1440 = vmatprep.subr.mxu0 0.0
    %1441 = vmatpush1.msra.mxu0 0.0
    %1442 = vmatprep.subr.mxu0 0.0
    %1443 = vmatpush1.msra.mxu0 0.0
    %1444 = vmatprep.subr.mxu0 0.0
    %1445 = vmatpush1.msra.mxu0 0.0
    %1446 = vmatprep.subr.mxu0 0.0
    %1447 = vmatpush1.msra.mxu0 0.0
    %1448 = vmatprep.subr.mxu0 0.0
    %1449 = vmatpush1.msra.mxu0 %v1269
    %1450 = vmatprep.subr.mxu0 0.0
    %1451 = vmatpush1.msra.mxu0 %v1268
    %1452 = vmatprep.subr.mxu0 0.0
    %1453 = vmatpush2.msra.mxu0 0.0
    %1454 = vmatprep.subr.mxu0 0.0
    %1455 = vmatpush2.msra.mxu0 0.0
    %1456 = vmatprep.subr.mxu0 0.0
    %1457 = vmatpush2.msra.mxu0 0.0
    %1458 = vmatprep.subr.mxu0 0.0
    %1459 = vmatpush2.msra.mxu0 0.0
    %1460 = vmatprep.subr.mxu0 0.0
    %1461 = vmatpush2.msra.mxu0 0.0
    %1462 = vmatprep.subr.mxu0 0.0
    %1463 = vmatpush2.msra.mxu0 0.0
    %1464 = vmatprep.subr.mxu0 0.0
    %1465 = vmatpush2.msra.mxu0 0.0
    %1466 = vmatprep.subr.mxu0 0.0
    %1467 = vmatpush2.msra.mxu0 0.0
    %1468 = vmatprep.subr.mxu0 0.0
    %1469 = vmatpush2.msra.mxu0 0.0
    %1470 = vmatprep.subr.mxu0 0.0
    %1471 = vmatpush2.msra.mxu0 0.0
    %1472 = vmatprep.subr.mxu0 0.0
    %1473 = vmatpush2.msra.mxu0 0.0
    %1474 = vmatprep.subr.mxu0 0.0
    %1475 = vmatpush2.msra.mxu0 0.0
    %1476 = vmatprep.subr.mxu0 0.0
    %1477 = vmatpush2.msra.mxu0 0.0
    %1478 = vmatprep.subr.mxu0 0.0
    %1479 = vmatpush2.msra.mxu0 0.0
    %1480 = vmatprep.subr.mxu0 0.0
    %1481 = vmatpush2.msra.mxu0 0.0
    %1482 = vmatprep.subr.mxu0 0.0
    %1483 = vmatpush2.msra.mxu0 0.0
    %1484 = vmatprep.mubr.f32.mxu0 0.0
    %1485 = vmatmul.mubr.f32.gmra.mxu0 %v1418
    %v1486 = vpop.f32.mrf.mxu0
    %v1487 = vadd.f32 0.0, %v1486
    %v1488 = vpop.f32.mrf.mxu0
    %1489 = vdwg.mxu0
    %v1490 = vadd.f32 %v1412, %v1487
    %v1491 = vld [vmem:[#allocation22] sm:$0x1]
    %v1493 = vlaneseq
    %v1494 = vshrl.u32 %v1493, 7
    %v1495 = vsub.s32 0, %v1494
    %v1496 = vrot.slane %v1491, %v1495
    %v1498 = vadd.f32 %v1490, %v1496
    %v1499 = vld [vmem:[%s39] sm:$0xff]
    %v1500 = vld [vmem:[%s39 + $0x8] sm:$0xff]
    %1501 = vmatprep.subr.mxu0 0.0
    %1502 = vmatpush1.msra.mxu0 0.0
    %1503 = vmatprep.subr.mxu0 0.0
    %1504 = vmatpush1.msra.mxu0 0.0
    %1505 = vmatprep.subr.mxu0 0.0
    %1506 = vmatpush1.msra.mxu0 0.0
    %1507 = vmatprep.subr.mxu0 0.0
    %1508 = vmatpush1.msra.mxu0 0.0
    %1509 = vmatprep.subr.mxu0 0.0
    %1510 = vmatpush1.msra.mxu0 0.0
    %1511 = vmatprep.subr.mxu0 0.0
    %1512 = vmatpush1.msra.mxu0 0.0
    %1513 = vmatprep.subr.mxu0 0.0
    %1514 = vmatpush1.msra.mxu0 0.0
    %1515 = vmatprep.subr.mxu0 0.0
    %1516 = vmatpush1.msra.mxu0 0.0
    %1517 = vmatprep.subr.mxu0 0.0
    %1518 = vmatpush1.msra.mxu0 0.0
    %1519 = vmatprep.subr.mxu0 0.0
    %1520 = vmatpush1.msra.mxu0 0.0
    %1521 = vmatprep.subr.mxu0 0.0
    %1522 = vmatpush1.msra.mxu0 0.0
    %1523 = vmatprep.subr.mxu0 0.0
    %1524 = vmatpush1.msra.mxu0 0.0
    %1525 = vmatprep.subr.mxu0 0.0
    %1526 = vmatpush1.msra.mxu0 0.0
    %1527 = vmatprep.subr.mxu0 0.0
    %1528 = vmatpush1.msra.mxu0 0.0
    %1529 = vmatprep.subr.mxu0 0.0
    %1530 = vmatpush1.msra.mxu0 %v1500
    %1531 = vmatprep.subr.mxu0 0.0
    %1532 = vmatpush1.msra.mxu0 %v1499
    %1533 = vmatprep.subr.mxu0 0.0
    %1534 = vmatpush2.msra.mxu0 0.0
    %1535 = vmatprep.subr.mxu0 0.0
    %1536 = vmatpush2.msra.mxu0 0.0
    %1537 = vmatprep.subr.mxu0 0.0
    %1538 = vmatpush2.msra.mxu0 0.0
    %1539 = vmatprep.subr.mxu0 0.0
    %1540 = vmatpush2.msra.mxu0 0.0
    %1541 = vmatprep.subr.mxu0 0.0
    %1542 = vmatpush2.msra.mxu0 0.0
    %1543 = vmatprep.subr.mxu0 0.0
    %1544 = vmatpush2.msra.mxu0 0.0
    %1545 = vmatprep.subr.mxu0 0.0
    %1546 = vmatpush2.msra.mxu0 0.0
    %1547 = vmatprep.subr.mxu0 0.0
    %1548 = vmatpush2.msra.mxu0 0.0
    %1549 = vmatprep.subr.mxu0 0.0
    %1550 = vmatpush2.msra.mxu0 0.0
    %1551 = vmatprep.subr.mxu0 0.0
    %1552 = vmatpush2.msra.mxu0 0.0
    %1553 = vmatprep.subr.mxu0 0.0
    %1554 = vmatpush2.msra.mxu0 0.0
    %1555 = vmatprep.subr.mxu0 0.0
    %1556 = vmatpush2.msra.mxu0 0.0
    %1557 = vmatprep.subr.mxu0 0.0
    %1558 = vmatpush2.msra.mxu0 0.0
    %1559 = vmatprep.subr.mxu0 0.0
    %1560 = vmatpush2.msra.mxu0 0.0
    %1561 = vmatprep.subr.mxu0 0.0
    %1562 = vmatpush2.msra.mxu0 0.0
    %1563 = vmatprep.subr.mxu0 0.0
    %1564 = vmatpush2.msra.mxu0 0.0
    %1565 = vmatprep.mubr.f32.mxu0 0.0
    %1566 = vmatmul.mubr.f32.gmra.mxu0 %v729
    %v1567 = vpop.f32.mrf.mxu0
    %v1568 = vadd.f32 0.0, %v1567
    %v1569 = vpop.f32.mrf.mxu0
    %1570 = vdwg.mxu0
    %1571 = vst.msk [vmem:[#allocation24] sm:$0x3] %vm1195, %v1498
    %vm1572 = vcmask 1024
    %1573 = vst.msk [vmem:[%s65] sm:$0x3] %vm1572, %v1261
    %v1574 = vsub.f32 1.0, %v1261
    %1576 = vset.pattern.permute.xlu0 0
    %1577 = vperm.xlu0 %1576, %v1574
    %v1578 = vpop.permute.xlu0 %1577
    %v1580 = vlaneseq
    %v1581 = vshrl.u32 %v1580, 7
    %v1582 = vsub.s32 %v871, %v1581
    %v1583 = vrot.slane %v946, %v1582
    %v1584 = vlaneseq
    %v1585 = vshrl.u32 %v1584, 7
    %v1586 = vsub.s32 %v871, %v1585
    %v1587 = vrot.slane %v951, %v1586
    %v1588 = vsel %vm880, %v1587, %v1583
    %v1590 = vmul.f32 %v1578, %v1588
    %1591 = vst.msk [vmem:[#allocation25] sm:$0x3] %vm922, %v1590
    %1593 = vst.msk [vmem:[#allocation27] sm:$0x3] %vm1195, %v728
    %1595 = vst.msk [vmem:[#allocation28] sm:$0x3] %vm1195, %v653
    %1597 = vst.msk [vmem:[#allocation30] sm:$0x3] %vm1177, %v1272
    %1598 = vst.msk [vmem:[%s75] sm:$0x3] %vm922, %v883
    %1599 = vst.msk [vmem:[#allocation31] sm:$0x3] %vm1195, %v1568
    // Predicated region
    $region174: #{tpu_custom_call.1} parent=1 // pred_check
      _
    $region175: #{tpu_custom_call.1} parent=1 // pred_check_branch
      %1601 = sbr.rel (0) target = $region177
    $region176: #{tpu_custom_call.1} parent=1 // pred_region
      %s1603 = ssub.s32 32, 32
      %1604 = vsyncadd [#allocation6], %s1603
      %s1606 = sshll.u32 [#allocation24], 4
      %s1607 = int_to_ptr.vmem [resolvable:$true] %s1606
      %1609 = dma.vmem_to_hbm [thread:$0]  %s1607, 32, %s63, [#allocation6]
    $region177: #{tpu_custom_call.1} parent=1 // pred_fallthru
      _
    // Predicated region
    $region178: #{tpu_custom_call.1} parent=1 // pred_check
      _
    $region179: #{tpu_custom_call.1} parent=1 // pred_check_branch
      %1611 = sbr.rel (0) target = $region181
    $region180: #{tpu_custom_call.1} parent=1 // pred_region
      _
    $region181: #{tpu_custom_call.1} parent=1 // pred_fallthru
      _
    // Predicated region
    $region182: #{tpu_custom_call.1} parent=1 // pred_check
      _
    $region183: #{tpu_custom_call.1} parent=1 // pred_check_branch
      %1613 = sbr.rel (0) target = $region185
    $region184: #{tpu_custom_call.1} parent=1 // pred_region
      %s1615 = ssub.s32 32, 32
      %1616 = vsyncadd [#allocation26], %s1615
      %s1618 = sshll.u32 [#allocation25], 4
      %s1619 = int_to_ptr.vmem [resolvable:$true] %s1618
      %1621 = dma.vmem_to_hbm [thread:$0]  %s1619, 32, %s67, [#allocation26]
    $region185: #{tpu_custom_call.1} parent=1 // pred_fallthru
      _
    // Predicated region
    $region186: #{tpu_custom_call.1} parent=1 // pred_check
      _
    $region187: #{tpu_custom_call.1} parent=1 // pred_check_branch
      %1623 = sbr.rel (0) target = $region189
    $region188: #{tpu_custom_call.1} parent=1 // pred_region
      %s1625 = ssub.s32 32, 32
      %1626 = vsyncadd [#allocation26], %s1625
      %s1628 = sshll.u32 [#allocation27], 4
      %s1629 = int_to_ptr.vmem [resolvable:$true] %s1628
      %1631 = dma.vmem_to_hbm [thread:$0]  %s1629, 32, %s69, [#allocation26]
    $region189: #{tpu_custom_call.1} parent=1 // pred_fallthru
      _
    // Predicated region
    $region190: #{tpu_custom_call.1} parent=1 // pred_check
      _
    $region191: #{tpu_custom_call.1} parent=1 // pred_check_branch
      %1633 = sbr.rel (0) target = $region193
    $region192: #{tpu_custom_call.1} parent=1 // pred_region
      %s1635 = ssub.s32 32, 32
      %1636 = vsyncadd [#allocation29], %s1635
      %s1638 = sshll.u32 [#allocation28], 4
      %s1639 = int_to_ptr.vmem [resolvable:$true] %s1638
      %1641 = dma.vmem_to_hbm [thread:$0]  %s1639, 32, %s71, [#allocation29]
    $region193: #{tpu_custom_call.1} parent=1 // pred_fallthru
      _
    // Predicated region
    $region194: #{tpu_custom_call.1} parent=1 // pred_check
      _
    $region195: #{tpu_custom_call.1} parent=1 // pred_check_branch
      %1643 = sbr.rel (0) target = $region197
    $region196: #{tpu_custom_call.1} parent=1 // pred_region
      %s1645 = ssub.s32 32, 32
      %1646 = vsyncadd [#allocation29], %s1645
      %s1648 = sshll.u32 [#allocation30], 4
      %s1649 = int_to_ptr.vmem [resolvable:$true] %s1648
      %1651 = dma.vmem_to_hbm [thread:$0]  %s1649, 32, %s73, [#allocation29]
    $region197: #{tpu_custom_call.1} parent=1 // pred_fallthru
      _
    // Predicated region
    $region198: #{tpu_custom_call.1} parent=1 // pred_check
      _
    $region199: #{tpu_custom_call.1} parent=1 // pred_check_branch
      %1653 = sbr.rel (0) target = $region201
    $region200: #{tpu_custom_call.1} parent=1 // pred_region
      _
    $region201: #{tpu_custom_call.1} parent=1 // pred_fallthru
      _
    // Predicated region
    $region202: #{tpu_custom_call.1} parent=1 // pred_check
      _
    $region203: #{tpu_custom_call.1} parent=1 // pred_check_branch
      %1655 = sbr.rel (0) target = $region205
    $region204: #{tpu_custom_call.1} parent=1 // pred_region
      %s1657 = ssub.s32 32, 32
      %1658 = vsyncadd [#allocation32], %s1657
      %s1660 = sshll.u32 [#allocation31], 4
      %s1661 = int_to_ptr.vmem [resolvable:$true] %s1660
      %1663 = dma.vmem_to_hbm [thread:$0]  %s1661, 32, %s77, [#allocation32]
    $region205: #{tpu_custom_call.1} parent=1 // pred_fallthru
      _
    // Predicated region
    $region206: #{tpu_custom_call.1} parent=1 // pred_check
      _
    $region207: #{tpu_custom_call.1} parent=1 // pred_check_branch
      %1665 = sbr.rel (0) target = $region209
    $region208: #{tpu_custom_call.1} parent=1 // pred_region
      %1666 = dma.done [#allocation6], 32
    $region209: #{tpu_custom_call.1} parent=1 // pred_fallthru
      _
    // Predicated region
    $region210: #{tpu_custom_call.1} parent=1 // pred_check
      _
    $region211: #{tpu_custom_call.1} parent=1 // pred_check_branch
      %1668 = sbr.rel (0) target = $region213
    $region212: #{tpu_custom_call.1} parent=1 // pred_region
      _
    $region213: #{tpu_custom_call.1} parent=1 // pred_fallthru
      _
    // Predicated region
    $region214: #{tpu_custom_call.1} parent=1 // pred_check
      _
    $region215: #{tpu_custom_call.1} parent=1 // pred_check_branch
      %1670 = sbr.rel (0) target = $region217
    $region216: #{tpu_custom_call.1} parent=1 // pred_region
      %1671 = dma.done [#allocation26], 32
    $region217: #{tpu_custom_call.1} parent=1 // pred_fallthru
      _
    // Predicated region
    $region218: #{tpu_custom_call.1} parent=1 // pred_check
      _
    $region219: #{tpu_custom_call.1} parent=1 // pred_check_branch
      %1673 = sbr.rel (0) target = $region221
    $region220: #{tpu_custom_call.1} parent=1 // pred_region
      %1674 = dma.done [#allocation26], 32
    $region221: #{tpu_custom_call.1} parent=1 // pred_fallthru
      _
    // Predicated region
    $region222: #{tpu_custom_call.1} parent=1 // pred_check
      _
    $region223: #{tpu_custom_call.1} parent=1 // pred_check_branch
      %1676 = sbr.rel (0) target = $region225
    $region224: #{tpu_custom_call.1} parent=1 // pred_region
      %1677 = dma.done [#allocation29], 32
    $region225: #{tpu_custom_call.1} parent=1 // pred_fallthru
      _
    // Predicated region
    $region226: #{tpu_custom_call.1} parent=1 // pred_check
      _
    $region227: #{tpu_custom_call.1} parent=1 // pred_check_branch
      %1679 = sbr.rel (0) target = $region229
    $region228: #{tpu_custom_call.1} parent=1 // pred_region
      %1680 = dma.done [#allocation29], 32
    $region229: #{tpu_custom_call.1} parent=1 // pred_fallthru
      _
    // Predicated region
    $region230: #{tpu_custom_call.1} parent=1 // pred_check
      _
    $region231: #{tpu_custom_call.1} parent=1 // pred_check_branch
      %1682 = sbr.rel (0) target = $region233
    $region232: #{tpu_custom_call.1} parent=1 // pred_region
      _
    $region233: #{tpu_custom_call.1} parent=1 // pred_fallthru
      _
    // Predicated region
    $region234: #{tpu_custom_call.1} parent=1 // pred_check
      _
    $region235: #{tpu_custom_call.1} parent=1 // pred_check_branch
      %1684 = sbr.rel (0) target = $region237
    $region236: #{tpu_custom_call.1} parent=1 // pred_region
      %1685 = dma.done [#allocation32], 32
    $region237: #{tpu_custom_call.1} parent=1 // pred_fallthru
      _
    %1686 = vsyncpa [#allocation5], 1
    %1687 = vsyncpa [#allocation8], 1
    %1688 = vsyncpa [#allocation11], 1
    %1689 = vsyncpa [#allocation14], 1
    %1690 = vsyncpa [#allocation17], 1
    %1691 = vsyncpa [#allocation20], 1
    %1692 = vsyncpa [#allocation23], 1
    %1693 = vsyncpa [#allocation6], 1
    %1694 = vsyncpa [#allocation26], 1
    %1695 = vsyncpa [#allocation29], 1
    %1696 = vsyncpa [#allocation32], 1

</llo_original>
